<compile_context>
chip_gen: v6e
topology: v6e:2x2x1
jax: 0.10.0
libtpu: 0.0.40
codegen_flags: <defaults>
</compile_context>

<pallas_src>
import functools

import jax
import jax.numpy as jnp
from jax import lax
from jax.experimental import pallas as pl
from jax.experimental.pallas import tpu as pltpu


# ---------------------------------------------------------------------------
# Kernel: one batch sample per grid program (grid axis is "parallel")
# ---------------------------------------------------------------------------
def _discriminator_kernel(*refs, num_blocks: int, K: int, T: int, N: int, R: int):
  # refs layout:
  #   x_ref [1, T, N, dimIn], a_ref [N, N] (bf16),
  #   per block: h0 [1,R], wx [K*d_in, 3R] (bf16), wh_ur [K*R, 2R] (bf16),
  #              wh_c [K*R, R] (bf16), b [1, 3R],
  #   w_out [R, 1],
  #   out_ref [1, 1, 1],
  #   scratch: zu/zr/zc [T, N, R] (hoisted x-path pre-activations), seq [T, N, R]
  x_ref, a_ref = refs[0], refs[1]
  off = 2
  block_refs = []
  for _ in range(num_blocks):
    block_refs.append(refs[off:off + 5])
    off += 5
  wout_ref = refs[off]
  out_ref = refs[off + 1]
  zu_ref, zr_ref, zc_ref, seq_ref = refs[off + 2], refs[off + 3], refs[off + 4], refs[off + 5]

  def diffuse_cat_2d(v, A):
    # v: f32 [N, F]; A: bf16 [N, N] -> f32 [N, K*F] = [v | Av | ... | A^{K-1}v]
    feats = [v]
    cur = v
    for _ in range(K - 1):
      cur = jnp.dot(A, cur.astype(jnp.bfloat16), preferred_element_type=jnp.float32)
      feats.append(cur)
    return feats[0] if K == 1 else jnp.concatenate(feats, axis=-1)

  h_last = None
  for blk in range(num_blocks):
    h0_ref, wx_ref, whur_ref, whc_ref, b_ref = block_refs[blk]
    is_last = (blk + 1 == num_blocks)

    # -------- x-path hoist (h-independent): all T timesteps in one MXU push --------
    if blk == 0:
      xs = x_ref[0].astype(jnp.float32)            # [T, N, dimIn]
    else:
      xs = seq_ref[...]                            # previous block's hidden sequence [T, N, R]
    d_in = xs.shape[-1]
    A_b = jnp.broadcast_to(a_ref[...], (T, N, N))  # bf16; hoisted, reused for all K powers
    feats = [xs]
    cur = xs
    for _ in range(K - 1):
      cur = jnp.einsum('tij,tjf->tif', A_b, cur.astype(jnp.bfloat16),
                       preferred_element_type=jnp.float32)
      feats.append(cur)
    feats = feats[0] if K == 1 else jnp.concatenate(feats, axis=-1)    # [T, N, K*d_in]
    zx = jnp.dot(feats.reshape(T * N, K * d_in).astype(jnp.bfloat16),
                 wx_ref[...], preferred_element_type=jnp.float32)      # [T*N, 3R] (u|r|c)
    zx = zx + b_ref[...].astype(jnp.float32)
    # Gate-major scratch: per-step reads are full [N, R] tiles (no lane slicing in the loop).
    zu_ref[...] = zx[:, 0 * R:1 * R].reshape(T, N, R)
    zr_ref[...] = zx[:, 1 * R:2 * R].reshape(T, N, R)
    zc_ref[...] = zx[:, 2 * R:3 * R].reshape(T, N, R)

    # -------- serial recurrence: only the h-dependent path remains --------
    def step(t, h, is_last=is_last, whur_ref=whur_ref, whc_ref=whc_ref):
      A = a_ref[...]                                # VMEM reload: cheap, avoids vreg pressure
      zu = zu_ref[t]
      zr = zr_ref[t]
      zc = zc_ref[t]
      fh = diffuse_cat_2d(h, A)                                        # [N, K*R]
      z_ur = jnp.dot(fh.astype(jnp.bfloat16), whur_ref[...],
                     preferred_element_type=jnp.float32)               # [N, 2R] (u|r)
      u = jax.nn.sigmoid(zu + z_ur[:, :R])
      r = jax.nn.sigmoid(zr + z_ur[:, R:])
      frh = diffuse_cat_2d(r * h, A)                                   # [N, K*R]
      c = jnp.tanh(zc + jnp.dot(frh.astype(jnp.bfloat16), whc_ref[...],
                                preferred_element_type=jnp.float32))
      h_new = u * h + (1.0 - u) * c
      if not is_last:
        seq_ref[t] = h_new          # only written; this block's x-path already consumed seq
      return h_new

    h0 = jnp.broadcast_to(h0_ref[...].astype(jnp.float32), (N, R))
    h_last = lax.fori_loop(0, T, step, h0)

  # Per-sample readout: sum of Output(h_last) over nodes; mean + bias finished in the wrapper.
  logits = jnp.dot(h_last, wout_ref[...], preferred_element_type=jnp.float32)   # [N, 1]
  out_ref[...] = jnp.sum(logits).reshape(1, 1, 1)


# ---------------------------------------------------------------------------
# Wrapper / glue
# ---------------------------------------------------------------------------
def discriminator_forward(params, X, M_x, A_x, label):
  """Matches Discriminator.forward(X, M_x, A_x, label) -> scalar label_pred.

  X: [B, T, N, dimIn]. M_x and label are accepted but unused for label_pred
  (the reference forward only returns the prediction).
  """
  del M_x, label
  B, T, N, dimIn = X.shape
  blocks = params["blocks"]
  num_blocks = len(blocks)
  K = params["K"]
  R = blocks[0]["h0"].shape[-1]

  x = X.astype(jnp.float32)
  A = A_x.astype(jnp.bfloat16)           # bf16 storage; matmuls accumulate in f32

  inputs = [x, A]
  in_specs = [
      pl.BlockSpec((1, T, N, dimIn), lambda b: (b, 0, 0, 0)),   # streamed per batch program
      pl.BlockSpec((N, N), lambda b: (0, 0)),
  ]
  for p in blocks:
    inputs += [p["h0"], p["wx"], p["wh_ur"], p["wh_c"], p["b"]]
    in_specs += [
        pl.BlockSpec(p["h0"].shape, lambda b: (0, 0)),
        pl.BlockSpec(p["wx"].shape, lambda b: (0, 0)),
        pl.BlockSpec(p["wh_ur"].shape, lambda b: (0, 0)),
        pl.BlockSpec(p["wh_c"].shape, lambda b: (0, 0)),
        pl.BlockSpec(p["b"].shape, lambda b: (0, 0)),
    ]
  inputs += [params["w_out"]]
  in_specs += [pl.BlockSpec(params["w_out"].shape, lambda b: (0, 0))]

  # Rough cost hint for XLA scheduling around this long-running single kernel.
  flops = 0
  d = dimIn
  for _ in range(num_blocks):
    flops += 2 * B * T * (K - 1) * N * N * d               # x diffusion
    flops += 2 * B * T * N * (K * d) * (3 * R)             # fused x projection
    flops += 2 * B * T * 2 * (K - 1) * N * N * R           # h / r*h diffusion
    flops += 2 * B * T * N * (K * R) * (3 * R)             # fused h projections
    d = R
  flops += 2 * B * N * R
  transcendentals = 3 * B * T * num_blocks * N * R
  bytes_accessed = sum(int(a.size) * a.dtype.itemsize for a in inputs) + B * 4

  kernel = functools.partial(
      _discriminator_kernel, num_blocks=num_blocks, K=K, T=T, N=N, R=R)

  out = pl.pallas_call(
      kernel,
      grid=(B,),
      out_shape=jax.ShapeDtypeStruct((B, 1, 1), jnp.float32),
      in_specs=in_specs,
      out_specs=pl.BlockSpec((1, 1, 1), lambda b: (b, 0, 0)),
      scratch_shapes=[
          pltpu.VMEM((T, N, R), jnp.float32),   # zu: hoisted x-path pre-activation (update gate)
          pltpu.VMEM((T, N, R), jnp.float32),   # zr: reset gate
          pltpu.VMEM((T, N, R), jnp.float32),   # zc: candidate gate
          pltpu.VMEM((T, N, R), jnp.float32),   # inter-block hidden sequence
      ],
      compiler_params=pltpu.CompilerParams(
          dimension_semantics=("parallel",),          # batches independent; uses both TCs on v7x
          vmem_limit_bytes=48 * 1024 * 1024),         # explicit budget (< 64 MiB/TC on v7x)
      cost_estimate=pl.CostEstimate(
          flops=flops, transcendentals=transcendentals, bytes_accessed=bytes_accessed),
  )(*inputs)

  # Readout output dim is 1, so mean(x@w + b) == mean(x@w) + b (this shortcut relies on that).
  return jnp.sum(out) / (B * N) + params["b_out"][0]


# ---------------------------------------------------------------------------
# Deterministic parameter init (synthetic, no checkpoint load)
# ---------------------------------------------------------------------------
def _spectral_normalize(w):
  sigma = jnp.linalg.svd(w, compute_uv=False)[0]
  return w / sigma


def init_params(key, dimIn, dimRnn, numRNNs, K):
  blocks = []
  d_in = dimIn
  for _ in range(numRNNs):
    F = d_in + dimRnn
    key, ku, kr, kc, kh = jax.random.split(key, 5)

    def gate(kg, d_in=d_in, F=F):
      w = jax.random.normal(kg, (K * F, dimRnn), jnp.float32) / jnp.sqrt(K * F)
      w = _spectral_normalize(w).reshape(K, F, dimRnn)
      return w[:, :d_in, :], w[:, d_in:, :]          # x-part [K,d_in,R], h-part [K,R,R]

    wux, wuh = gate(ku)
    wrx, wrh = gate(kr)
    wcx, wch = gate(kc)
    # Fused packings: K folded into the contraction dim (rows grouped by diffusion order k),
    # gates fused along columns.  Stored bf16 (MXU input dtype); accumulation stays f32.
    wx = jnp.concatenate([wux, wrx, wcx], axis=-1).reshape(K * d_in, 3 * dimRnn)
    wh_ur = jnp.concatenate([wuh, wrh], axis=-1).reshape(K * dimRnn, 2 * dimRnn)
    wh_c = wch.reshape(K * dimRnn, dimRnn)
    blocks.append(dict(
        h0=0.01 * jax.random.normal(kh, (1, dimRnn), jnp.float32),
        wx=wx.astype(jnp.bfloat16),        # [K*d_in, 3R] (u|r|c fused)
        wh_ur=wh_ur.astype(jnp.bfloat16),  # [K*R, 2R]    (u|r fused)
        wh_c=wh_c.astype(jnp.bfloat16),    # [K*R, R]
        b=jnp.zeros((1, 3 * dimRnn), jnp.float32),
    ))
    d_in = dimRnn

  key, ko = jax.random.split(key)
  w_out = _spectral_normalize(
      jax.random.normal(ko, (dimRnn, 1), jnp.float32) / jnp.sqrt(dimRnn))
  b_out = jnp.zeros((1,), jnp.float32)
  # TODO(synk): nn.BCEWithLogitsLoss criterion is defined in __init__ but never used in
  # forward(); intentionally not implemented.
  return dict(blocks=blocks, w_out=w_out, b_out=b_out, K=K)


# ---------------------------------------------------------------------------
if __name__ == "__main__":
  key = jax.random.PRNGKey(0)
  B, T, N = 2, 6, 8
  dimIn, dimRnn, numRNNs, K = 4, 32, 2, 2

  kx, ka, kp = jax.random.split(key, 3)
  X = jax.random.normal(kx, (B, T, N, dimIn), jnp.float32)
  M_x = jnp.ones((B, T, N, dimIn), jnp.float32)
  A_raw = jax.random.uniform(ka, (N, N), jnp.float32)
  A_x = A_raw / jnp.sum(A_raw, axis=1, keepdims=True)     # row-normalized support
  label = jnp.ones((), jnp.float32)

  params = init_params(kp, dimIn, dimRnn, numRNNs, K)
  label_pred = discriminator_forward(params, X, M_x, A_x, label)
  label_pred = jax.block_until_ready(label_pred)
  assert label_pred.shape == () and bool(jnp.isfinite(label_pred))
  print("KERNEL_OK")
</pallas_src>

<mosaic_0001>
module attributes {stable_mosaic.version = 11 : i64} {
  func.func @_discriminator_kernel(%arg0: i32, %arg1: memref<1x6x8x4xf32, #tpu.memory_space<vmem>>, %arg2: memref<8x8xbf16, #tpu.memory_space<vmem>>, %arg3: memref<1x32xf32, #tpu.memory_space<vmem>>, %arg4: memref<8x96xbf16, #tpu.memory_space<vmem>>, %arg5: memref<64x64xbf16, #tpu.memory_space<vmem>>, %arg6: memref<64x32xbf16, #tpu.memory_space<vmem>>, %arg7: memref<1x96xf32, #tpu.memory_space<vmem>>, %arg8: memref<1x32xf32, #tpu.memory_space<vmem>>, %arg9: memref<64x96xbf16, #tpu.memory_space<vmem>>, %arg10: memref<64x64xbf16, #tpu.memory_space<vmem>>, %arg11: memref<64x32xbf16, #tpu.memory_space<vmem>>, %arg12: memref<1x96xf32, #tpu.memory_space<vmem>>, %arg13: memref<32x1xf32, #tpu.memory_space<vmem>>, %arg14: memref<1x1x1xf32, #tpu.memory_space<vmem>>, %arg15: memref<6x8x32xf32, #tpu.memory_space<vmem>>, %arg16: memref<6x8x32xf32, #tpu.memory_space<vmem>>, %arg17: memref<6x8x32xf32, #tpu.memory_space<vmem>>, %arg18: memref<6x8x32xf32, #tpu.memory_space<vmem>>) attributes {dimension_semantics = [#tpu.dimension_semantics<parallel>], iteration_bounds = array<i64: 2>, scalar_prefetch = 0 : i64, scratch_operands = 4 : i64, tpu.core_type = #tpu.core_type<tc>, window_params = [{transform_indices = @transform_0, window_bounds = array<i64: 1, 6, 8, 4>}, {pipeline_mode = #tpu.pipeline_mode<synchronous>, transform_indices = @transform_1, window_bounds = array<i64: 8, 8>}, {pipeline_mode = #tpu.pipeline_mode<synchronous>, transform_indices = @transform_2, window_bounds = array<i64: 1, 32>}, {pipeline_mode = #tpu.pipeline_mode<synchronous>, transform_indices = @transform_3, window_bounds = array<i64: 8, 96>}, {pipeline_mode = #tpu.pipeline_mode<synchronous>, transform_indices = @transform_4, window_bounds = array<i64: 64, 64>}, {pipeline_mode = #tpu.pipeline_mode<synchronous>, transform_indices = @transform_5, window_bounds = array<i64: 64, 32>}, {pipeline_mode = #tpu.pipeline_mode<synchronous>, transform_indices = @transform_6, window_bounds = array<i64: 1, 96>}, {pipeline_mode = #tpu.pipeline_mode<synchronous>, transform_indices = @transform_7, window_bounds = array<i64: 1, 32>}, {pipeline_mode = #tpu.pipeline_mode<synchronous>, transform_indices = @transform_8, window_bounds = array<i64: 64, 96>}, {pipeline_mode = #tpu.pipeline_mode<synchronous>, transform_indices = @transform_9, window_bounds = array<i64: 64, 64>}, {pipeline_mode = #tpu.pipeline_mode<synchronous>, transform_indices = @transform_10, window_bounds = array<i64: 64, 32>}, {pipeline_mode = #tpu.pipeline_mode<synchronous>, transform_indices = @transform_11, window_bounds = array<i64: 1, 96>}, {pipeline_mode = #tpu.pipeline_mode<synchronous>, transform_indices = @transform_12, window_bounds = array<i64: 32, 1>}, {transform_indices = @transform_13, window_bounds = array<i64: 1, 1, 1>}]} {
    %c0 = arith.constant 0 : index
    %c0_0 = arith.constant 0 : index
    %c0_1 = arith.constant 0 : index
    %c0_2 = arith.constant 0 : index
    %0 = vector.load %arg1[%c0, %c0_0, %c0_1, %c0_2] : memref<1x6x8x4xf32, #tpu.memory_space<vmem>>, vector<1x6x8x4xf32>
    %1 = vector.shape_cast %0 : vector<1x6x8x4xf32> to vector<6x8x4xf32>
    %c0_3 = arith.constant 0 : index
    %c0_4 = arith.constant 0 : index
    %2 = vector.load %arg2[%c0_3, %c0_4] : memref<8x8xbf16, #tpu.memory_space<vmem>>, vector<8x8xbf16>
    %3 = vector.shape_cast %2 : vector<8x8xbf16> to vector<1x8x8xbf16>
    %4 = vector.broadcast %3 : vector<1x8x8xbf16> to vector<6x8x8xbf16>
    %5 = arith.truncf %1 : vector<6x8x4xf32> to vector<6x8x4xbf16>
    "tpu.trace_start"() <{level = 10 : i32, message = "tij,tjf->tif"}> : () -> ()
    %cst = arith.constant dense<0.000000e+00> : vector<6x8x4xf32>
    %6 = tpu.matmul %4, %5, %cst {dimension_numbers = #tpu.dot_dimension_numbers<[2], [1], [1], [2], [0, 0, 0, 1, 1, 2], [0], [0]>} : vector<6x8x8xbf16>, vector<6x8x4xbf16>, vector<6x8x4xf32> -> vector<6x8x4xf32>
    "tpu.trace_stop"() : () -> ()
    %7 = tpu.concatenate %1, %6 in 2 : vector<6x8x4xf32>, vector<6x8x4xf32> -> vector<6x8x8xf32>
    %8 = vector.shape_cast %7 : vector<6x8x8xf32> to vector<48x8xf32>
    %9 = arith.truncf %8 : vector<48x8xf32> to vector<48x8xbf16>
    %c0_5 = arith.constant 0 : index
    %c0_6 = arith.constant 0 : index
    %10 = vector.load %arg4[%c0_5, %c0_6] : memref<8x96xbf16, #tpu.memory_space<vmem>>, vector<8x96xbf16>
    %cst_7 = arith.constant dense<0.000000e+00> : vector<48x96xf32>
    %11 = tpu.matmul %9, %10, %cst_7 {dimension_numbers = #tpu.dot_dimension_numbers<[1], [0], [0], [1], [0, 0, 1, 1], [], []>} : vector<48x8xbf16>, vector<8x96xbf16>, vector<48x96xf32> -> vector<48x96xf32>
    %c0_8 = arith.constant 0 : index
    %c0_9 = arith.constant 0 : index
    %12 = vector.load %arg7[%c0_8, %c0_9] : memref<1x96xf32, #tpu.memory_space<vmem>>, vector<1x96xf32>
    %13 = vector.broadcast %12 : vector<1x96xf32> to vector<48x96xf32>
    %14 = arith.addf %11, %13 : vector<48x96xf32>
    %15 = vector.extract_strided_slice %14 {offsets = [0, 0], sizes = [48, 32], strides = [1, 1]} : vector<48x96xf32> to vector<48x32xf32>
    %16 = vector.shape_cast %15 : vector<48x32xf32> to vector<6x8x32xf32>
    %c0_10 = arith.constant 0 : index
    %c0_11 = arith.constant 0 : index
    %c0_12 = arith.constant 0 : index
    %17 = vector.load %arg15[%c0_10, %c0_11, %c0_12] : memref<6x8x32xf32, #tpu.memory_space<vmem>>, vector<6x8x32xf32>
    tpu.vector_store %arg15[%c0_10, %c0_11, %c0_12], %16 {strides = array<i32>} : memref<6x8x32xf32, #tpu.memory_space<vmem>>, vector<6x8x32xf32>,
    %18 = vector.extract_strided_slice %14 {offsets = [0, 32], sizes = [48, 32], strides = [1, 1]} : vector<48x96xf32> to vector<48x32xf32>
    %19 = vector.shape_cast %18 : vector<48x32xf32> to vector<6x8x32xf32>
    %c0_13 = arith.constant 0 : index
    %c0_14 = arith.constant 0 : index
    %c0_15 = arith.constant 0 : index
    %20 = vector.load %arg16[%c0_13, %c0_14, %c0_15] : memref<6x8x32xf32, #tpu.memory_space<vmem>>, vector<6x8x32xf32>
    tpu.vector_store %arg16[%c0_13, %c0_14, %c0_15], %19 {strides = array<i32>} : memref<6x8x32xf32, #tpu.memory_space<vmem>>, vector<6x8x32xf32>,
    %21 = vector.extract_strided_slice %14 {offsets = [0, 64], sizes = [48, 32], strides = [1, 1]} : vector<48x96xf32> to vector<48x32xf32>
    %22 = vector.shape_cast %21 : vector<48x32xf32> to vector<6x8x32xf32>
    %c0_16 = arith.constant 0 : index
    %c0_17 = arith.constant 0 : index
    %c0_18 = arith.constant 0 : index
    %23 = vector.load %arg17[%c0_16, %c0_17, %c0_18] : memref<6x8x32xf32, #tpu.memory_space<vmem>>, vector<6x8x32xf32>
    tpu.vector_store %arg17[%c0_16, %c0_17, %c0_18], %22 {strides = array<i32>} : memref<6x8x32xf32, #tpu.memory_space<vmem>>, vector<6x8x32xf32>,
    %c0_19 = arith.constant 0 : index
    %c0_20 = arith.constant 0 : index
    %24 = vector.load %arg3[%c0_19, %c0_20] : memref<1x32xf32, #tpu.memory_space<vmem>>, vector<1x32xf32>
    %25 = vector.shape_cast %24 : vector<1x32xf32> to vector<1x32xf32>
    %26 = vector.broadcast %25 : vector<1x32xf32> to vector<8x32xf32>
    %c0_i32 = arith.constant 0 : i32
    %c6_i32 = arith.constant 6 : i32
    %27 = arith.addi %c0_i32, %c6_i32 : i32
    %c1_i32 = arith.constant 1 : i32
    %28 = scf.for %arg19 = %c0_i32 to %27 step %c1_i32 iter_args(%arg20 = %26) -> (vector<8x32xf32>)  : i32 {
      %c0_55 = arith.constant 0 : index
      %c0_56 = arith.constant 0 : index
      %65 = vector.load %arg2[%c0_55, %c0_56] : memref<8x8xbf16, #tpu.memory_space<vmem>>, vector<8x8xbf16>
      %66 = arith.index_cast %arg19 : i32 to index
      %c0_57 = arith.constant 0 : index
      %c0_58 = arith.constant 0 : index
      %67 = vector.load %arg15[%66, %c0_57, %c0_58] : memref<6x8x32xf32, #tpu.memory_space<vmem>>, vector<1x8x32xf32>
      %68 = vector.shape_cast %67 : vector<1x8x32xf32> to vector<8x32xf32>
      %69 = arith.index_cast %arg19 : i32 to index
      %c0_59 = arith.constant 0 : index
      %c0_60 = arith.constant 0 : index
      %70 = vector.load %arg16[%69, %c0_59, %c0_60] : memref<6x8x32xf32, #tpu.memory_space<vmem>>, vector<1x8x32xf32>
      %71 = vector.shape_cast %70 : vector<1x8x32xf32> to vector<8x32xf32>
      %72 = arith.index_cast %arg19 : i32 to index
      %c0_61 = arith.constant 0 : index
      %c0_62 = arith.constant 0 : index
      %73 = vector.load %arg17[%72, %c0_61, %c0_62] : memref<6x8x32xf32, #tpu.memory_space<vmem>>, vector<1x8x32xf32>
      %74 = vector.shape_cast %73 : vector<1x8x32xf32> to vector<8x32xf32>
      %75 = arith.truncf %arg20 : vector<8x32xf32> to vector<8x32xbf16>
      %cst_63 = arith.constant dense<0.000000e+00> : vector<8x32xf32>
      %76 = tpu.matmul %65, %75, %cst_63 {dimension_numbers = #tpu.dot_dimension_numbers<[1], [0], [0], [1], [0, 0, 1, 1], [], []>} : vector<8x8xbf16>, vector<8x32xbf16>, vector<8x32xf32> -> vector<8x32xf32>
      %77 = tpu.concatenate %arg20, %76 in 1 : vector<8x32xf32>, vector<8x32xf32> -> vector<8x64xf32>
      %78 = arith.truncf %77 : vector<8x64xf32> to vector<8x64xbf16>
      %c0_64 = arith.constant 0 : index
      %c0_65 = arith.constant 0 : index
      %79 = vector.load %arg5[%c0_64, %c0_65] : memref<64x64xbf16, #tpu.memory_space<vmem>>, vector<64x64xbf16>
      %cst_66 = arith.constant dense<0.000000e+00> : vector<8x64xf32>
      %80 = tpu.matmul %78, %79, %cst_66 {dimension_numbers = #tpu.dot_dimension_numbers<[1], [0], [0], [1], [0, 0, 1, 1], [], []>} : vector<8x64xbf16>, vector<64x64xbf16>, vector<8x64xf32> -> vector<8x64xf32>
      %81 = vector.extract_strided_slice %80 {offsets = [0, 0], sizes = [8, 32], strides = [1, 1]} : vector<8x64xf32> to vector<8x32xf32>
      %82 = arith.addf %68, %81 : vector<8x32xf32>
      %83 = arith.negf %82 : vector<8x32xf32>
      %84 = math.exp %83 : vector<8x32xf32>
      %cst_67 = arith.constant 1.000000e+00 : f32
      %85 = vector.broadcast %cst_67 : f32 to vector<8x32xf32>
      %86 = arith.addf %85, %84 : vector<8x32xf32>
      %87 = arith.divf %85, %86 : vector<8x32xf32>
      %88 = vector.extract_strided_slice %80 {offsets = [0, 32], sizes = [8, 32], strides = [1, 1]} : vector<8x64xf32> to vector<8x32xf32>
      %89 = arith.addf %71, %88 : vector<8x32xf32>
      %90 = arith.negf %89 : vector<8x32xf32>
      %91 = math.exp %90 : vector<8x32xf32>
      %cst_68 = arith.constant 1.000000e+00 : f32
      %92 = vector.broadcast %cst_68 : f32 to vector<8x32xf32>
      %93 = arith.addf %92, %91 : vector<8x32xf32>
      %94 = arith.divf %92, %93 : vector<8x32xf32>
      %95 = arith.mulf %94, %arg20 : vector<8x32xf32>
      %96 = arith.truncf %95 : vector<8x32xf32> to vector<8x32xbf16>
      %cst_69 = arith.constant dense<0.000000e+00> : vector<8x32xf32>
      %97 = tpu.matmul %65, %96, %cst_69 {dimension_numbers = #tpu.dot_dimension_numbers<[1], [0], [0], [1], [0, 0, 1, 1], [], []>} : vector<8x8xbf16>, vector<8x32xbf16>, vector<8x32xf32> -> vector<8x32xf32>
      %98 = tpu.concatenate %95, %97 in 1 : vector<8x32xf32>, vector<8x32xf32> -> vector<8x64xf32>
      %99 = arith.truncf %98 : vector<8x64xf32> to vector<8x64xbf16>
      %c0_70 = arith.constant 0 : index
      %c0_71 = arith.constant 0 : index
      %100 = vector.load %arg6[%c0_70, %c0_71] : memref<64x32xbf16, #tpu.memory_space<vmem>>, vector<64x32xbf16>
      %cst_72 = arith.constant dense<0.000000e+00> : vector<8x32xf32>
      %101 = tpu.matmul %99, %100, %cst_72 {dimension_numbers = #tpu.dot_dimension_numbers<[1], [0], [0], [1], [0, 0, 1, 1], [], []>} : vector<8x64xbf16>, vector<64x32xbf16>, vector<8x32xf32> -> vector<8x32xf32>
      %102 = arith.addf %74, %101 : vector<8x32xf32>
      %103 = math.tanh %102 : vector<8x32xf32>
      %104 = arith.mulf %87, %arg20 : vector<8x32xf32>
      %cst_73 = arith.constant 1.000000e+00 : f32
      %105 = vector.broadcast %cst_73 : f32 to vector<8x32xf32>
      %106 = arith.subf %105, %87 : vector<8x32xf32>
      %107 = arith.mulf %106, %103 : vector<8x32xf32>
      %108 = arith.addf %104, %107 : vector<8x32xf32>
      %109 = arith.index_cast %arg19 : i32 to index
      %c0_74 = arith.constant 0 : index
      %c0_75 = arith.constant 0 : index
      %110 = vector.load %arg18[%109, %c0_74, %c0_75] : memref<6x8x32xf32, #tpu.memory_space<vmem>>, vector<1x8x32xf32>
      %111 = vector.shape_cast %110 : vector<1x8x32xf32> to vector<8x32xf32>
      %112 = vector.shape_cast %108 : vector<8x32xf32> to vector<1x8x32xf32>
      tpu.vector_store %arg18[%109, %c0_74, %c0_75], %112 {strides = array<i32>} : memref<6x8x32xf32, #tpu.memory_space<vmem>>, vector<1x8x32xf32>,
      scf.yield %108 : vector<8x32xf32>
    }
    %c6_i32_21 = arith.constant 6 : i32
    %c0_22 = arith.constant 0 : index
    %c0_23 = arith.constant 0 : index
    %c0_24 = arith.constant 0 : index
    %29 = vector.load %arg18[%c0_22, %c0_23, %c0_24] : memref<6x8x32xf32, #tpu.memory_space<vmem>>, vector<6x8x32xf32>
    %c0_25 = arith.constant 0 : index
    %c0_26 = arith.constant 0 : index
    %30 = vector.load %arg2[%c0_25, %c0_26] : memref<8x8xbf16, #tpu.memory_space<vmem>>, vector<8x8xbf16>
    %31 = vector.shape_cast %30 : vector<8x8xbf16> to vector<1x8x8xbf16>
    %32 = vector.broadcast %31 : vector<1x8x8xbf16> to vector<6x8x8xbf16>
    %33 = arith.truncf %29 : vector<6x8x32xf32> to vector<6x8x32xbf16>
    "tpu.trace_start"() <{level = 10 : i32, message = "tij,tjf->tif"}> : () -> ()
    %cst_27 = arith.constant dense<0.000000e+00> : vector<6x8x32xf32>
    %34 = tpu.matmul %32, %33, %cst_27 {dimension_numbers = #tpu.dot_dimension_numbers<[2], [1], [1], [2], [0, 0, 0, 1, 1, 2], [0], [0]>} : vector<6x8x8xbf16>, vector<6x8x32xbf16>, vector<6x8x32xf32> -> vector<6x8x32xf32>
    "tpu.trace_stop"() : () -> ()
    %35 = tpu.concatenate %29, %34 in 2 : vector<6x8x32xf32>, vector<6x8x32xf32> -> vector<6x8x64xf32>
    %36 = vector.shape_cast %35 : vector<6x8x64xf32> to vector<48x64xf32>
    %37 = arith.truncf %36 : vector<48x64xf32> to vector<48x64xbf16>
    %c0_28 = arith.constant 0 : index
    %c0_29 = arith.constant 0 : index
    %38 = vector.load %arg9[%c0_28, %c0_29] : memref<64x96xbf16, #tpu.memory_space<vmem>>, vector<64x96xbf16>
    %cst_30 = arith.constant dense<0.000000e+00> : vector<48x96xf32>
    %39 = tpu.matmul %37, %38, %cst_30 {dimension_numbers = #tpu.dot_dimension_numbers<[1], [0], [0], [1], [0, 0, 1, 1], [], []>} : vector<48x64xbf16>, vector<64x96xbf16>, vector<48x96xf32> -> vector<48x96xf32>
    %c0_31 = arith.constant 0 : index
    %c0_32 = arith.constant 0 : index
    %40 = vector.load %arg12[%c0_31, %c0_32] : memref<1x96xf32, #tpu.memory_space<vmem>>, vector<1x96xf32>
    %41 = vector.broadcast %40 : vector<1x96xf32> to vector<48x96xf32>
    %42 = arith.addf %39, %41 : vector<48x96xf32>
    %43 = vector.extract_strided_slice %42 {offsets = [0, 0], sizes = [48, 32], strides = [1, 1]} : vector<48x96xf32> to vector<48x32xf32>
    %44 = vector.shape_cast %43 : vector<48x32xf32> to vector<6x8x32xf32>
    %c0_33 = arith.constant 0 : index
    %c0_34 = arith.constant 0 : index
    %c0_35 = arith.constant 0 : index
    %45 = vector.load %arg15[%c0_33, %c0_34, %c0_35] : memref<6x8x32xf32, #tpu.memory_space<vmem>>, vector<6x8x32xf32>
    tpu.vector_store %arg15[%c0_33, %c0_34, %c0_35], %44 {strides = array<i32>} : memref<6x8x32xf32, #tpu.memory_space<vmem>>, vector<6x8x32xf32>,
    %46 = vector.extract_strided_slice %42 {offsets = [0, 32], sizes = [48, 32], strides = [1, 1]} : vector<48x96xf32> to vector<48x32xf32>
    %47 = vector.shape_cast %46 : vector<48x32xf32> to vector<6x8x32xf32>
    %c0_36 = arith.constant 0 : index
    %c0_37 = arith.constant 0 : index
    %c0_38 = arith.constant 0 : index
    %48 = vector.load %arg16[%c0_36, %c0_37, %c0_38] : memref<6x8x32xf32, #tpu.memory_space<vmem>>, vector<6x8x32xf32>
    tpu.vector_store %arg16[%c0_36, %c0_37, %c0_38], %47 {strides = array<i32>} : memref<6x8x32xf32, #tpu.memory_space<vmem>>, vector<6x8x32xf32>,
    %49 = vector.extract_strided_slice %42 {offsets = [0, 64], sizes = [48, 32], strides = [1, 1]} : vector<48x96xf32> to vector<48x32xf32>
    %50 = vector.shape_cast %49 : vector<48x32xf32> to vector<6x8x32xf32>
    %c0_39 = arith.constant 0 : index
    %c0_40 = arith.constant 0 : index
    %c0_41 = arith.constant 0 : index
    %51 = vector.load %arg17[%c0_39, %c0_40, %c0_41] : memref<6x8x32xf32, #tpu.memory_space<vmem>>, vector<6x8x32xf32>
    tpu.vector_store %arg17[%c0_39, %c0_40, %c0_41], %50 {strides = array<i32>} : memref<6x8x32xf32, #tpu.memory_space<vmem>>, vector<6x8x32xf32>,
    %c0_42 = arith.constant 0 : index
    %c0_43 = arith.constant 0 : index
    %52 = vector.load %arg8[%c0_42, %c0_43] : memref<1x32xf32, #tpu.memory_space<vmem>>, vector<1x32xf32>
    %53 = vector.shape_cast %52 : vector<1x32xf32> to vector<1x32xf32>
    %54 = vector.broadcast %53 : vector<1x32xf32> to vector<8x32xf32>
    %c0_i32_44 = arith.constant 0 : i32
    %c6_i32_45 = arith.constant 6 : i32
    %55 = arith.addi %c0_i32_44, %c6_i32_45 : i32
    %c1_i32_46 = arith.constant 1 : i32
    %56 = scf.for %arg19 = %c0_i32_44 to %55 step %c1_i32_46 iter_args(%arg20 = %54) -> (vector<8x32xf32>)  : i32 {
      %c0_55 = arith.constant 0 : index
      %c0_56 = arith.constant 0 : index
      %65 = vector.load %arg2[%c0_55, %c0_56] : memref<8x8xbf16, #tpu.memory_space<vmem>>, vector<8x8xbf16>
      %66 = arith.index_cast %arg19 : i32 to index
      %c0_57 = arith.constant 0 : index
      %c0_58 = arith.constant 0 : index
      %67 = vector.load %arg15[%66, %c0_57, %c0_58] : memref<6x8x32xf32, #tpu.memory_space<vmem>>, vector<1x8x32xf32>
      %68 = vector.shape_cast %67 : vector<1x8x32xf32> to vector<8x32xf32>
      %69 = arith.index_cast %arg19 : i32 to index
      %c0_59 = arith.constant 0 : index
      %c0_60 = arith.constant 0 : index
      %70 = vector.load %arg16[%69, %c0_59, %c0_60] : memref<6x8x32xf32, #tpu.memory_space<vmem>>, vector<1x8x32xf32>
      %71 = vector.shape_cast %70 : vector<1x8x32xf32> to vector<8x32xf32>
      %72 = arith.index_cast %arg19 : i32 to index
      %c0_61 = arith.constant 0 : index
      %c0_62 = arith.constant 0 : index
      %73 = vector.load %arg17[%72, %c0_61, %c0_62] : memref<6x8x32xf32, #tpu.memory_space<vmem>>, vector<1x8x32xf32>
      %74 = vector.shape_cast %73 : vector<1x8x32xf32> to vector<8x32xf32>
      %75 = arith.truncf %arg20 : vector<8x32xf32> to vector<8x32xbf16>
      %cst_63 = arith.constant dense<0.000000e+00> : vector<8x32xf32>
      %76 = tpu.matmul %65, %75, %cst_63 {dimension_numbers = #tpu.dot_dimension_numbers<[1], [0], [0], [1], [0, 0, 1, 1], [], []>} : vector<8x8xbf16>, vector<8x32xbf16>, vector<8x32xf32> -> vector<8x32xf32>
      %77 = tpu.concatenate %arg20, %76 in 1 : vector<8x32xf32>, vector<8x32xf32> -> vector<8x64xf32>
      %78 = arith.truncf %77 : vector<8x64xf32> to vector<8x64xbf16>
      %c0_64 = arith.constant 0 : index
      %c0_65 = arith.constant 0 : index
      %79 = vector.load %arg10[%c0_64, %c0_65] : memref<64x64xbf16, #tpu.memory_space<vmem>>, vector<64x64xbf16>
      %cst_66 = arith.constant dense<0.000000e+00> : vector<8x64xf32>
      %80 = tpu.matmul %78, %79, %cst_66 {dimension_numbers = #tpu.dot_dimension_numbers<[1], [0], [0], [1], [0, 0, 1, 1], [], []>} : vector<8x64xbf16>, vector<64x64xbf16>, vector<8x64xf32> -> vector<8x64xf32>
      %81 = vector.extract_strided_slice %80 {offsets = [0, 0], sizes = [8, 32], strides = [1, 1]} : vector<8x64xf32> to vector<8x32xf32>
      %82 = arith.addf %68, %81 : vector<8x32xf32>
      %83 = arith.negf %82 : vector<8x32xf32>
      %84 = math.exp %83 : vector<8x32xf32>
      %cst_67 = arith.constant 1.000000e+00 : f32
      %85 = vector.broadcast %cst_67 : f32 to vector<8x32xf32>
      %86 = arith.addf %85, %84 : vector<8x32xf32>
      %87 = arith.divf %85, %86 : vector<8x32xf32>
      %88 = vector.extract_strided_slice %80 {offsets = [0, 32], sizes = [8, 32], strides = [1, 1]} : vector<8x64xf32> to vector<8x32xf32>
      %89 = arith.addf %71, %88 : vector<8x32xf32>
      %90 = arith.negf %89 : vector<8x32xf32>
      %91 = math.exp %90 : vector<8x32xf32>
      %cst_68 = arith.constant 1.000000e+00 : f32
      %92 = vector.broadcast %cst_68 : f32 to vector<8x32xf32>
      %93 = arith.addf %92, %91 : vector<8x32xf32>
      %94 = arith.divf %92, %93 : vector<8x32xf32>
      %95 = arith.mulf %94, %arg20 : vector<8x32xf32>
      %96 = arith.truncf %95 : vector<8x32xf32> to vector<8x32xbf16>
      %cst_69 = arith.constant dense<0.000000e+00> : vector<8x32xf32>
      %97 = tpu.matmul %65, %96, %cst_69 {dimension_numbers = #tpu.dot_dimension_numbers<[1], [0], [0], [1], [0, 0, 1, 1], [], []>} : vector<8x8xbf16>, vector<8x32xbf16>, vector<8x32xf32> -> vector<8x32xf32>
      %98 = tpu.concatenate %95, %97 in 1 : vector<8x32xf32>, vector<8x32xf32> -> vector<8x64xf32>
      %99 = arith.truncf %98 : vector<8x64xf32> to vector<8x64xbf16>
      %c0_70 = arith.constant 0 : index
      %c0_71 = arith.constant 0 : index
      %100 = vector.load %arg11[%c0_70, %c0_71] : memref<64x32xbf16, #tpu.memory_space<vmem>>, vector<64x32xbf16>
      %cst_72 = arith.constant dense<0.000000e+00> : vector<8x32xf32>
      %101 = tpu.matmul %99, %100, %cst_72 {dimension_numbers = #tpu.dot_dimension_numbers<[1], [0], [0], [1], [0, 0, 1, 1], [], []>} : vector<8x64xbf16>, vector<64x32xbf16>, vector<8x32xf32> -> vector<8x32xf32>
      %102 = arith.addf %74, %101 : vector<8x32xf32>
      %103 = math.tanh %102 : vector<8x32xf32>
      %104 = arith.mulf %87, %arg20 : vector<8x32xf32>
      %cst_73 = arith.constant 1.000000e+00 : f32
      %105 = vector.broadcast %cst_73 : f32 to vector<8x32xf32>
      %106 = arith.subf %105, %87 : vector<8x32xf32>
      %107 = arith.mulf %106, %103 : vector<8x32xf32>
      %108 = arith.addf %104, %107 : vector<8x32xf32>
      scf.yield %108 : vector<8x32xf32>
    }
    %c6_i32_47 = arith.constant 6 : i32
    %c0_48 = arith.constant 0 : index
    %c0_49 = arith.constant 0 : index
    %57 = vector.load %arg13[%c0_48, %c0_49] : memref<32x1xf32, #tpu.memory_space<vmem>>, vector<32x1xf32>
    %cst_50 = arith.constant dense<0.000000e+00> : vector<8x1xf32>
    %58 = tpu.matmul %56, %57, %cst_50 {dimension_numbers = #tpu.dot_dimension_numbers<[1], [0], [0], [1], [0, 0, 1, 1], [], []>} : vector<8x32xf32>, vector<32x1xf32>, vector<8x1xf32> -> vector<8x1xf32>
    %59 = vector.shape_cast %58 : vector<8x1xf32> to vector<1x8x1xf32>
    %cst_51 = arith.constant dense<0.000000e+00> : vector<1xf32>
    %60 = vector.multi_reduction <add>, %59, %cst_51 [1, 2] : vector<1x8x1xf32> to vector<1xf32>
    %61 = vector.shape_cast %60 : vector<1xf32> to vector<1x1x1xf32>
    %62 = vector.extract %61[0, 0, 0] : f32 from vector<1x1x1xf32>
    %63 = vector.broadcast %62 : f32 to vector<1x1x1xf32>
    %c0_52 = arith.constant 0 : index
    %c0_53 = arith.constant 0 : index
    %c0_54 = arith.constant 0 : index
    %64 = vector.load %arg14[%c0_52, %c0_53, %c0_54] : memref<1x1x1xf32, #tpu.memory_space<vmem>>, vector<1x1x1xf32>
    tpu.vector_store %arg14[%c0_52, %c0_53, %c0_54], %63 {strides = array<i32>} : memref<1x1x1xf32, #tpu.memory_space<vmem>>, vector<1x1x1xf32>,
    return
  }
  func.func @transform_0(%arg0: i32) -> (i32, i32, i32, i32) {
    %c0_i32 = arith.constant 0 : i32
    %c0_i32_0 = arith.constant 0 : i32
    %c0_i32_1 = arith.constant 0 : i32
    %c0_i32_2 = arith.constant 0 : i32
    return %arg0, %c0_i32, %c0_i32_0, %c0_i32_1 : i32, i32, i32, i32
  }
  func.func @transform_1(%arg0: i32) -> (i32, i32) {
    %c0_i32 = arith.constant 0 : i32
    %c0_i32_0 = arith.constant 0 : i32
    %c0_i32_1 = arith.constant 0 : i32
    return %c0_i32, %c0_i32_0 : i32, i32
  }
  func.func @transform_2(%arg0: i32) -> (i32, i32) {
    %c0_i32 = arith.constant 0 : i32
    %c0_i32_0 = arith.constant 0 : i32
    %c0_i32_1 = arith.constant 0 : i32
    return %c0_i32, %c0_i32_0 : i32, i32
  }
  func.func @transform_3(%arg0: i32) -> (i32, i32) {
    %c0_i32 = arith.constant 0 : i32
    %c0_i32_0 = arith.constant 0 : i32
    %c0_i32_1 = arith.constant 0 : i32
    return %c0_i32, %c0_i32_0 : i32, i32
  }
  func.func @transform_4(%arg0: i32) -> (i32, i32) {
    %c0_i32 = arith.constant 0 : i32
    %c0_i32_0 = arith.constant 0 : i32
    %c0_i32_1 = arith.constant 0 : i32
    return %c0_i32, %c0_i32_0 : i32, i32
  }
  func.func @transform_5(%arg0: i32) -> (i32, i32) {
    %c0_i32 = arith.constant 0 : i32
    %c0_i32_0 = arith.constant 0 : i32
    %c0_i32_1 = arith.constant 0 : i32
    return %c0_i32, %c0_i32_0 : i32, i32
  }
  func.func @transform_6(%arg0: i32) -> (i32, i32) {
    %c0_i32 = arith.constant 0 : i32
    %c0_i32_0 = arith.constant 0 : i32
    %c0_i32_1 = arith.constant 0 : i32
    return %c0_i32, %c0_i32_0 : i32, i32
  }
  func.func @transform_7(%arg0: i32) -> (i32, i32) {
    %c0_i32 = arith.constant 0 : i32
    %c0_i32_0 = arith.constant 0 : i32
    %c0_i32_1 = arith.constant 0 : i32
    return %c0_i32, %c0_i32_0 : i32, i32
  }
  func.func @transform_8(%arg0: i32) -> (i32, i32) {
    %c0_i32 = arith.constant 0 : i32
    %c0_i32_0 = arith.constant 0 : i32
    %c0_i32_1 = arith.constant 0 : i32
    return %c0_i32, %c0_i32_0 : i32, i32
  }
  func.func @transform_9(%arg0: i32) -> (i32, i32) {
    %c0_i32 = arith.constant 0 : i32
    %c0_i32_0 = arith.constant 0 : i32
    %c0_i32_1 = arith.constant 0 : i32
    return %c0_i32, %c0_i32_0 : i32, i32
  }
  func.func @transform_10(%arg0: i32) -> (i32, i32) {
    %c0_i32 = arith.constant 0 : i32
    %c0_i32_0 = arith.constant 0 : i32
    %c0_i32_1 = arith.constant 0 : i32
    return %c0_i32, %c0_i32_0 : i32, i32
  }
  func.func @transform_11(%arg0: i32) -> (i32, i32) {
    %c0_i32 = arith.constant 0 : i32
    %c0_i32_0 = arith.constant 0 : i32
    %c0_i32_1 = arith.constant 0 : i32
    return %c0_i32, %c0_i32_0 : i32, i32
  }
  func.func @transform_12(%arg0: i32) -> (i32, i32) {
    %c0_i32 = arith.constant 0 : i32
    %c0_i32_0 = arith.constant 0 : i32
    %c0_i32_1 = arith.constant 0 : i32
    return %c0_i32, %c0_i32_0 : i32, i32
  }
  func.func @transform_13(%arg0: i32) -> (i32, i32, i32) {
    %c0_i32 = arith.constant 0 : i32
    %c0_i32_0 = arith.constant 0 : i32
    %c0_i32_1 = arith.constant 0 : i32
    return %arg0, %c0_i32, %c0_i32_0 : i32, i32, i32
  }
}

</mosaic_0001>

<llo_original>
// kernel: tpu_custom_call.1
$region0: #{tpu_custom_call.1}
  #allocation0 [shape = 'u32[]', space=smem, size = 0x4, offset = 0x4, fixed_abs, tag = 'smem constant byte address 0x4 - core index']
  #allocation1 [shape = 'u32[144,128]{1,0:T(1,128)}', space=vmem, size = 0x12000, scoped, tag = 'internal scratch']
  #allocation2 [shape = 'f32[6,8,32]{2,1,0:T(8,128)}', space=vmem, size = 0x6000, scoped, tag = 'scratch operand']
  #allocation3 [shape = 'f32[6,8,32]{2,1,0:T(8,128)}', space=vmem, size = 0x6000, scoped, tag = 'scratch operand']
  #allocation4 [shape = 'f32[6,8,32]{2,1,0:T(8,128)}', space=vmem, size = 0x6000, scoped, tag = 'scratch operand']
  #allocation5 [shape = 'f32[6,8,32]{2,1,0:T(8,128)}', space=vmem, size = 0x6000, scoped, tag = 'scratch operand']
  %s0 = inlined_call_operand.vmem [shape: f32[2,6,8,4], index: 0, kind: input, shape index: {}]
  %s1 = inlined_call_operand.vmem [shape: bf16[8,8], index: 1, kind: input, shape index: {}]
  %s2 = inlined_call_operand.vmem [shape: f32[1,32], index: 2, kind: input, shape index: {}]
  %s3 = inlined_call_operand.vmem [shape: bf16[8,96], index: 3, kind: input, shape index: {}]
  %s4 = inlined_call_operand.vmem [shape: bf16[64,64], index: 4, kind: input, shape index: {}]
  %s5 = inlined_call_operand.vmem [shape: bf16[64,32], index: 5, kind: input, shape index: {}]
  %s6 = inlined_call_operand.vmem [shape: f32[1,96], index: 6, kind: input, shape index: {}]
  %s7 = inlined_call_operand.vmem [shape: f32[1,32], index: 7, kind: input, shape index: {}]
  %s8 = inlined_call_operand.vmem [shape: bf16[64,96], index: 8, kind: input, shape index: {}]
  %s9 = inlined_call_operand.vmem [shape: bf16[64,64], index: 9, kind: input, shape index: {}]
  %s10 = inlined_call_operand.vmem [shape: bf16[64,32], index: 10, kind: input, shape index: {}]
  %s11 = inlined_call_operand.vmem [shape: f32[1,96], index: 11, kind: input, shape index: {}]
  %s12 = inlined_call_operand.vmem [shape: f32[32,1], index: 12, kind: input, shape index: {}]
  %s13 = inlined_call_operand.vmem [shape: f32[2,1,1], index: 13, kind: output, shape index: {}]
  %s14 = sld [smem:[#allocation0]]
  $region99: #{tpu_custom_call.1} parent=0
    _
  %s16 = ssub.s32 1, %s14
  %s17 = scalar_select 0, %s16, %s14
  loop: start=0, step=1, limit=4
  $region2: #{tpu_custom_call.1} parent=0 // loop_pre_header
    _
  $region3: #{tpu_custom_call.1} parent=0 // loop_header
    %s19 = sphi 0, %s23
    %p20 = scmp.ge.s32.totalorder %s19, 4
    %s29 = sphi 0, %s31
    %s32 = sphi 0, %s29
    %s33 = sphi 0, %s32
    %s49 = sphi 0, %s33
    %s53 = sphi 0, %s53
    %s55 = sphi 0, %s53
    %s56 = sphi 0, %s55
    %s70 = sphi 0, %s56
    %s74 = sphi 0, %s74
    %s76 = sphi 0, %s74
    %s77 = sphi 0, %s76
    %s91 = sphi 0, %s77
    %s95 = sphi 0, %s95
    %s97 = sphi 0, %s95
    %s98 = sphi 0, %s97
    %s112 = sphi 0, %s98
    %s116 = sphi 0, %s116
    %s118 = sphi 0, %s116
    %s119 = sphi 0, %s118
    %s133 = sphi 0, %s119
    %s137 = sphi 0, %s137
    %s139 = sphi 0, %s137
    %s140 = sphi 0, %s139
    %s154 = sphi 0, %s140
    %s158 = sphi 0, %s158
    %s160 = sphi 0, %s158
    %s161 = sphi 0, %s160
    %s175 = sphi 0, %s161
    %s179 = sphi 0, %s179
    %s181 = sphi 0, %s179
    %s182 = sphi 0, %s181
    %s196 = sphi 0, %s182
    %s200 = sphi 0, %s200
    %s202 = sphi 0, %s200
    %s203 = sphi 0, %s202
    %s217 = sphi 0, %s203
    %s221 = sphi 0, %s221
    %s223 = sphi 0, %s221
    %s224 = sphi 0, %s223
    %s238 = sphi 0, %s224
    %s242 = sphi 0, %s242
    %s244 = sphi 0, %s242
    %s245 = sphi 0, %s244
    %s259 = sphi 0, %s245
    %s263 = sphi 0, %s263
    %s265 = sphi 0, %s263
    %s266 = sphi 0, %s265
    %s280 = sphi 0, %s266
    %s284 = sphi 0, %s284
    %s286 = sphi 0, %s284
    %s287 = sphi 0, %s286
    %s301 = sphi 0, %s287
    %s307 = sphi 0, %s309
    %s310 = sphi 0, %s307
    %s311 = sphi 0, %s310
    %s327 = sphi 0, %s311
  $region4: #{tpu_custom_call.1} parent=0 // loop_header_branch
    %22 = sbr.rel (%p20) target = $region8
  $region5: #{tpu_custom_call.1} parent=0 // loop_body
    %s24 = ssub.s32 %s19, 1
    %s25 = ssub.s32 %s19, 2
    %s26 = sadd.s32 %s19, 1
    %s27 = ssub.s32 %s19, %s26
    %p28 = scmp.eq.s32.totalorder %s27, 0
    %s30 = sadd.s32 %s29, 1
    %s31 = scalar_select %p28, %s29, %s30
    %p34 = pneg %p28
    %p35 = scmp.eq.s32.totalorder %s19, 1
    %p36 = por %p34, %p35
    %p37 = scmp.ne.s32.totalorder %s29, %s32
    %p38 = scmp.eq.s32.totalorder %s19, 0
    %p39 = por %p37, %p38
    %p40 = scmp.ne.s32.totalorder %s29, %s32
    %p41 = scmp.eq.s32.totalorder %s24, 1
    %p42 = por %p40, %p41
    %p43 = scmp.ne.s32.totalorder %s32, %s33
    %p44 = scmp.eq.s32.totalorder %s24, 0
    %p45 = por %p43, %p44
    %p46 = scmp.ne.s32.totalorder %s32, %s33
    %p47 = scmp.eq.s32.totalorder %s25, 1
    %p48 = por %p46, %p47
    %p50 = scmp.ne.s32.totalorder %s33, %s49
    %p51 = scmp.eq.s32.totalorder %s25, 0
    %p52 = por %p50, %p51
    %s54 = sadd.s32 %s53, 1
    %p57 = scmp.eq.s32.totalorder %s19, 1
    %p58 = scmp.ne.s32.totalorder %s53, %s55
    %p59 = scmp.eq.s32.totalorder %s19, 0
    %p60 = por %p58, %p59
    %p61 = scmp.ne.s32.totalorder %s53, %s55
    %p62 = scmp.eq.s32.totalorder %s24, 1
    %p63 = por %p61, %p62
    %p64 = scmp.ne.s32.totalorder %s55, %s56
    %p65 = scmp.eq.s32.totalorder %s24, 0
    %p66 = por %p64, %p65
    %p67 = scmp.ne.s32.totalorder %s55, %s56
    %p68 = scmp.eq.s32.totalorder %s25, 1
    %p69 = por %p67, %p68
    %p71 = scmp.ne.s32.totalorder %s56, %s70
    %p72 = scmp.eq.s32.totalorder %s25, 0
    %p73 = por %p71, %p72
    %s75 = sadd.s32 %s74, 1
    %p78 = scmp.eq.s32.totalorder %s19, 1
    %p79 = scmp.ne.s32.totalorder %s74, %s76
    %p80 = scmp.eq.s32.totalorder %s19, 0
    %p81 = por %p79, %p80
    %p82 = scmp.ne.s32.totalorder %s74, %s76
    %p83 = scmp.eq.s32.totalorder %s24, 1
    %p84 = por %p82, %p83
    %p85 = scmp.ne.s32.totalorder %s76, %s77
    %p86 = scmp.eq.s32.totalorder %s24, 0
    %p87 = por %p85, %p86
    %p88 = scmp.ne.s32.totalorder %s76, %s77
    %p89 = scmp.eq.s32.totalorder %s25, 1
    %p90 = por %p88, %p89
    %p92 = scmp.ne.s32.totalorder %s77, %s91
    %p93 = scmp.eq.s32.totalorder %s25, 0
    %p94 = por %p92, %p93
    %s96 = sadd.s32 %s95, 1
    %p99 = scmp.eq.s32.totalorder %s19, 1
    %p100 = scmp.ne.s32.totalorder %s95, %s97
    %p101 = scmp.eq.s32.totalorder %s19, 0
    %p102 = por %p100, %p101
    %p103 = scmp.ne.s32.totalorder %s95, %s97
    %p104 = scmp.eq.s32.totalorder %s24, 1
    %p105 = por %p103, %p104
    %p106 = scmp.ne.s32.totalorder %s97, %s98
    %p107 = scmp.eq.s32.totalorder %s24, 0
    %p108 = por %p106, %p107
    %p109 = scmp.ne.s32.totalorder %s97, %s98
    %p110 = scmp.eq.s32.totalorder %s25, 1
    %p111 = por %p109, %p110
    %p113 = scmp.ne.s32.totalorder %s98, %s112
    %p114 = scmp.eq.s32.totalorder %s25, 0
    %p115 = por %p113, %p114
    %s117 = sadd.s32 %s116, 1
    %p120 = scmp.eq.s32.totalorder %s19, 1
    %p121 = scmp.ne.s32.totalorder %s116, %s118
    %p122 = scmp.eq.s32.totalorder %s19, 0
    %p123 = por %p121, %p122
    %p124 = scmp.ne.s32.totalorder %s116, %s118
    %p125 = scmp.eq.s32.totalorder %s24, 1
    %p126 = por %p124, %p125
    %p127 = scmp.ne.s32.totalorder %s118, %s119
    %p128 = scmp.eq.s32.totalorder %s24, 0
    %p129 = por %p127, %p128
    %p130 = scmp.ne.s32.totalorder %s118, %s119
    %p131 = scmp.eq.s32.totalorder %s25, 1
    %p132 = por %p130, %p131
    %p134 = scmp.ne.s32.totalorder %s119, %s133
    %p135 = scmp.eq.s32.totalorder %s25, 0
    %p136 = por %p134, %p135
    %s138 = sadd.s32 %s137, 1
    %p141 = scmp.eq.s32.totalorder %s19, 1
    %p142 = scmp.ne.s32.totalorder %s137, %s139
    %p143 = scmp.eq.s32.totalorder %s19, 0
    %p144 = por %p142, %p143
    %p145 = scmp.ne.s32.totalorder %s137, %s139
    %p146 = scmp.eq.s32.totalorder %s24, 1
    %p147 = por %p145, %p146
    %p148 = scmp.ne.s32.totalorder %s139, %s140
    %p149 = scmp.eq.s32.totalorder %s24, 0
    %p150 = por %p148, %p149
    %p151 = scmp.ne.s32.totalorder %s139, %s140
    %p152 = scmp.eq.s32.totalorder %s25, 1
    %p153 = por %p151, %p152
    %p155 = scmp.ne.s32.totalorder %s140, %s154
    %p156 = scmp.eq.s32.totalorder %s25, 0
    %p157 = por %p155, %p156
    %s159 = sadd.s32 %s158, 1
    %p162 = scmp.eq.s32.totalorder %s19, 1
    %p163 = scmp.ne.s32.totalorder %s158, %s160
    %p164 = scmp.eq.s32.totalorder %s19, 0
    %p165 = por %p163, %p164
    %p166 = scmp.ne.s32.totalorder %s158, %s160
    %p167 = scmp.eq.s32.totalorder %s24, 1
    %p168 = por %p166, %p167
    %p169 = scmp.ne.s32.totalorder %s160, %s161
    %p170 = scmp.eq.s32.totalorder %s24, 0
    %p171 = por %p169, %p170
    %p172 = scmp.ne.s32.totalorder %s160, %s161
    %p173 = scmp.eq.s32.totalorder %s25, 1
    %p174 = por %p172, %p173
    %p176 = scmp.ne.s32.totalorder %s161, %s175
    %p177 = scmp.eq.s32.totalorder %s25, 0
    %p178 = por %p176, %p177
    %s180 = sadd.s32 %s179, 1
    %p183 = scmp.eq.s32.totalorder %s19, 1
    %p184 = scmp.ne.s32.totalorder %s179, %s181
    %p185 = scmp.eq.s32.totalorder %s19, 0
    %p186 = por %p184, %p185
    %p187 = scmp.ne.s32.totalorder %s179, %s181
    %p188 = scmp.eq.s32.totalorder %s24, 1
    %p189 = por %p187, %p188
    %p190 = scmp.ne.s32.totalorder %s181, %s182
    %p191 = scmp.eq.s32.totalorder %s24, 0
    %p192 = por %p190, %p191
    %p193 = scmp.ne.s32.totalorder %s181, %s182
    %p194 = scmp.eq.s32.totalorder %s25, 1
    %p195 = por %p193, %p194
    %p197 = scmp.ne.s32.totalorder %s182, %s196
    %p198 = scmp.eq.s32.totalorder %s25, 0
    %p199 = por %p197, %p198
    %s201 = sadd.s32 %s200, 1
    %p204 = scmp.eq.s32.totalorder %s19, 1
    %p205 = scmp.ne.s32.totalorder %s200, %s202
    %p206 = scmp.eq.s32.totalorder %s19, 0
    %p207 = por %p205, %p206
    %p208 = scmp.ne.s32.totalorder %s200, %s202
    %p209 = scmp.eq.s32.totalorder %s24, 1
    %p210 = por %p208, %p209
    %p211 = scmp.ne.s32.totalorder %s202, %s203
    %p212 = scmp.eq.s32.totalorder %s24, 0
    %p213 = por %p211, %p212
    %p214 = scmp.ne.s32.totalorder %s202, %s203
    %p215 = scmp.eq.s32.totalorder %s25, 1
    %p216 = por %p214, %p215
    %p218 = scmp.ne.s32.totalorder %s203, %s217
    %p219 = scmp.eq.s32.totalorder %s25, 0
    %p220 = por %p218, %p219
    %s222 = sadd.s32 %s221, 1
    %p225 = scmp.eq.s32.totalorder %s19, 1
    %p226 = scmp.ne.s32.totalorder %s221, %s223
    %p227 = scmp.eq.s32.totalorder %s19, 0
    %p228 = por %p226, %p227
    %p229 = scmp.ne.s32.totalorder %s221, %s223
    %p230 = scmp.eq.s32.totalorder %s24, 1
    %p231 = por %p229, %p230
    %p232 = scmp.ne.s32.totalorder %s223, %s224
    %p233 = scmp.eq.s32.totalorder %s24, 0
    %p234 = por %p232, %p233
    %p235 = scmp.ne.s32.totalorder %s223, %s224
    %p236 = scmp.eq.s32.totalorder %s25, 1
    %p237 = por %p235, %p236
    %p239 = scmp.ne.s32.totalorder %s224, %s238
    %p240 = scmp.eq.s32.totalorder %s25, 0
    %p241 = por %p239, %p240
    %s243 = sadd.s32 %s242, 1
    %p246 = scmp.eq.s32.totalorder %s19, 1
    %p247 = scmp.ne.s32.totalorder %s242, %s244
    %p248 = scmp.eq.s32.totalorder %s19, 0
    %p249 = por %p247, %p248
    %p250 = scmp.ne.s32.totalorder %s242, %s244
    %p251 = scmp.eq.s32.totalorder %s24, 1
    %p252 = por %p250, %p251
    %p253 = scmp.ne.s32.totalorder %s244, %s245
    %p254 = scmp.eq.s32.totalorder %s24, 0
    %p255 = por %p253, %p254
    %p256 = scmp.ne.s32.totalorder %s244, %s245
    %p257 = scmp.eq.s32.totalorder %s25, 1
    %p258 = por %p256, %p257
    %p260 = scmp.ne.s32.totalorder %s245, %s259
    %p261 = scmp.eq.s32.totalorder %s25, 0
    %p262 = por %p260, %p261
    %s264 = sadd.s32 %s263, 1
    %p267 = scmp.eq.s32.totalorder %s19, 1
    %p268 = scmp.ne.s32.totalorder %s263, %s265
    %p269 = scmp.eq.s32.totalorder %s19, 0
    %p270 = por %p268, %p269
    %p271 = scmp.ne.s32.totalorder %s263, %s265
    %p272 = scmp.eq.s32.totalorder %s24, 1
    %p273 = por %p271, %p272
    %p274 = scmp.ne.s32.totalorder %s265, %s266
    %p275 = scmp.eq.s32.totalorder %s24, 0
    %p276 = por %p274, %p275
    %p277 = scmp.ne.s32.totalorder %s265, %s266
    %p278 = scmp.eq.s32.totalorder %s25, 1
    %p279 = por %p277, %p278
    %p281 = scmp.ne.s32.totalorder %s266, %s280
    %p282 = scmp.eq.s32.totalorder %s25, 0
    %p283 = por %p281, %p282
    %s285 = sadd.s32 %s284, 1
    %p288 = scmp.eq.s32.totalorder %s19, 1
    %p289 = scmp.ne.s32.totalorder %s284, %s286
    %p290 = scmp.eq.s32.totalorder %s19, 0
    %p291 = por %p289, %p290
    %p292 = scmp.ne.s32.totalorder %s284, %s286
    %p293 = scmp.eq.s32.totalorder %s24, 1
    %p294 = por %p292, %p293
    %p295 = scmp.ne.s32.totalorder %s286, %s287
    %p296 = scmp.eq.s32.totalorder %s24, 0
    %p297 = por %p295, %p296
    %p298 = scmp.ne.s32.totalorder %s286, %s287
    %p299 = scmp.eq.s32.totalorder %s25, 1
    %p300 = por %p298, %p299
    %p302 = scmp.ne.s32.totalorder %s287, %s301
    %p303 = scmp.eq.s32.totalorder %s25, 0
    %p304 = por %p302, %p303
    %s305 = ssub.s32 %s19, %s26
    %p306 = scmp.eq.s32.totalorder %s305, 0
    %s308 = sadd.s32 %s307, 1
    %s309 = scalar_select %p306, %s307, %s308
    %p312 = pneg %p306
    %p313 = scmp.eq.s32.totalorder %s19, 1
    %p314 = por %p312, %p313
    %p315 = scmp.ne.s32.totalorder %s307, %s310
    %p316 = scmp.eq.s32.totalorder %s19, 0
    %p317 = por %p315, %p316
    %p318 = scmp.ne.s32.totalorder %s307, %s310
    %p319 = scmp.eq.s32.totalorder %s24, 1
    %p320 = por %p318, %p319
    %p321 = scmp.ne.s32.totalorder %s310, %s311
    %p322 = scmp.eq.s32.totalorder %s24, 0
    %p323 = por %p321, %p322
    %p324 = scmp.ne.s32.totalorder %s310, %s311
    %p325 = scmp.eq.s32.totalorder %s25, 1
    %p326 = por %p324, %p325
    %p328 = scmp.ne.s32.totalorder %s311, %s327
    %p329 = scmp.eq.s32.totalorder %s25, 0
    %p330 = por %p328, %p329
    %p331 = scmp.le.s32.totalorder 1, %s19
    %p332 = scmp.lt.s32.totalorder %s19, 3
    %p333 = pnand %p331, %p332
    %p334 = pneg %p333
    // Predicated region
    $region9: #{tpu_custom_call.1} parent=5 // pred_check
      _
    $region10: #{tpu_custom_call.1} parent=5 // pred_check_branch
      %336 = sbr.rel (%p333) target = $region12
    $region11: #{tpu_custom_call.1} parent=5 // pred_region
      %s337 = ssub.s32 %s19, 1
      // Predicated region
      $region13: #{tpu_custom_call.1} parent=11 // pred_check
        %p338 = pneg %p66
      $region14: #{tpu_custom_call.1} parent=11 // pred_check_branch
        %340 = sbr.rel (%p338) target = $region16
      $region15: #{tpu_custom_call.1} parent=11 // pred_region
        _
      $region16: #{tpu_custom_call.1} parent=11 // pred_fallthru
        _
      // Predicated region
      $region17: #{tpu_custom_call.1} parent=11 // pred_check
        %p341 = pneg %p87
      $region18: #{tpu_custom_call.1} parent=11 // pred_check_branch
        %343 = sbr.rel (%p341) target = $region20
      $region19: #{tpu_custom_call.1} parent=11 // pred_region
        _
      $region20: #{tpu_custom_call.1} parent=11 // pred_fallthru
        _
      // Predicated region
      $region21: #{tpu_custom_call.1} parent=11 // pred_check
        %p344 = pneg %p108
      $region22: #{tpu_custom_call.1} parent=11 // pred_check_branch
        %346 = sbr.rel (%p344) target = $region24
      $region23: #{tpu_custom_call.1} parent=11 // pred_region
        _
      $region24: #{tpu_custom_call.1} parent=11 // pred_fallthru
        _
      // Predicated region
      $region25: #{tpu_custom_call.1} parent=11 // pred_check
        %p347 = pneg %p129
      $region26: #{tpu_custom_call.1} parent=11 // pred_check_branch
        %349 = sbr.rel (%p347) target = $region28
      $region27: #{tpu_custom_call.1} parent=11 // pred_region
        _
      $region28: #{tpu_custom_call.1} parent=11 // pred_fallthru
        _
      // Predicated region
      $region29: #{tpu_custom_call.1} parent=11 // pred_check
        %p350 = pneg %p150
      $region30: #{tpu_custom_call.1} parent=11 // pred_check_branch
        %352 = sbr.rel (%p350) target = $region32
      $region31: #{tpu_custom_call.1} parent=11 // pred_region
        _
      $region32: #{tpu_custom_call.1} parent=11 // pred_fallthru
        _
      // Predicated region
      $region33: #{tpu_custom_call.1} parent=11 // pred_check
        %p353 = pneg %p171
      $region34: #{tpu_custom_call.1} parent=11 // pred_check_branch
        %355 = sbr.rel (%p353) target = $region36
      $region35: #{tpu_custom_call.1} parent=11 // pred_region
        _
      $region36: #{tpu_custom_call.1} parent=11 // pred_fallthru
        _
      // Predicated region
      $region37: #{tpu_custom_call.1} parent=11 // pred_check
        %p356 = pneg %p192
      $region38: #{tpu_custom_call.1} parent=11 // pred_check_branch
        %358 = sbr.rel (%p356) target = $region40
      $region39: #{tpu_custom_call.1} parent=11 // pred_region
        _
      $region40: #{tpu_custom_call.1} parent=11 // pred_fallthru
        _
      // Predicated region
      $region41: #{tpu_custom_call.1} parent=11 // pred_check
        %p359 = pneg %p213
      $region42: #{tpu_custom_call.1} parent=11 // pred_check_branch
        %361 = sbr.rel (%p359) target = $region44
      $region43: #{tpu_custom_call.1} parent=11 // pred_region
        _
      $region44: #{tpu_custom_call.1} parent=11 // pred_fallthru
        _
      // Predicated region
      $region45: #{tpu_custom_call.1} parent=11 // pred_check
        %p362 = pneg %p234
      $region46: #{tpu_custom_call.1} parent=11 // pred_check_branch
        %364 = sbr.rel (%p362) target = $region48
      $region47: #{tpu_custom_call.1} parent=11 // pred_region
        _
      $region48: #{tpu_custom_call.1} parent=11 // pred_fallthru
        _
      // Predicated region
      $region49: #{tpu_custom_call.1} parent=11 // pred_check
        %p365 = pneg %p255
      $region50: #{tpu_custom_call.1} parent=11 // pred_check_branch
        %367 = sbr.rel (%p365) target = $region52
      $region51: #{tpu_custom_call.1} parent=11 // pred_region
        _
      $region52: #{tpu_custom_call.1} parent=11 // pred_fallthru
        _
      // Predicated region
      $region53: #{tpu_custom_call.1} parent=11 // pred_check
        %p368 = pneg %p276
      $region54: #{tpu_custom_call.1} parent=11 // pred_check_branch
        %370 = sbr.rel (%p368) target = $region56
      $region55: #{tpu_custom_call.1} parent=11 // pred_region
        _
      $region56: #{tpu_custom_call.1} parent=11 // pred_fallthru
        _
      // Predicated region
      $region57: #{tpu_custom_call.1} parent=11 // pred_check
        %p371 = pneg %p297
      $region58: #{tpu_custom_call.1} parent=11 // pred_check_branch
        %373 = sbr.rel (%p371) target = $region60
      $region59: #{tpu_custom_call.1} parent=11 // pred_region
        _
      $region60: #{tpu_custom_call.1} parent=11 // pred_fallthru
        _
    $region12: #{tpu_custom_call.1} parent=5 // pred_fallthru
      _
    %p374 = scmp.lt.s32.totalorder %s19, 2
    // Predicated region
    $region61: #{tpu_custom_call.1} parent=5 // pred_check
      %p375 = pneg %p374
    $region62: #{tpu_custom_call.1} parent=5 // pred_check_branch
      %377 = sbr.rel (%p375) target = $region64
    $region63: #{tpu_custom_call.1} parent=5 // pred_region
      // Predicated region
      $region65: #{tpu_custom_call.1} parent=63 // pred_check
        %p378 = pneg %p39
      $region66: #{tpu_custom_call.1} parent=63 // pred_check_branch
        %380 = sbr.rel (%p378) target = $region68
      $region67: #{tpu_custom_call.1} parent=63 // pred_region
        %p381 = scmp.lt.s32.totalorder %s19, 1
        %s382 = scalar_select %p381, %s19, 1
        %s383 = smul.addr %s382, 6
        %s384 = smul.addr %s383, 8
        %s385 = scalar_lea.vmem %s0, %s384
      $region68: #{tpu_custom_call.1} parent=63 // pred_fallthru
        _
    $region64: #{tpu_custom_call.1} parent=5 // pred_fallthru
      _
    %p386 = scmp.le.s32.totalorder 1, %s19
    %p387 = scmp.lt.s32.totalorder %s19, 3
    %p388 = pnand %p386, %p387
    %p389 = pneg %p388
    // Predicated region
    $region69: #{tpu_custom_call.1} parent=5 // pred_check
      _
    $region70: #{tpu_custom_call.1} parent=5 // pred_check_branch
      %391 = sbr.rel (%p388) target = $region72
    $region71: #{tpu_custom_call.1} parent=5 // pred_region
      %s392 = ssub.s32 %s19, 1
      %p393 = scmp.lt.s32.totalorder %s24, 1
      %s394 = scalar_select %p393, %s24, 1
      %s395 = smul.addr %s394, 6
      %s396 = smul.addr %s395, 8
      %s397 = scalar_lea.vmem %s0, %s396
      %p398 = pneg %p45
      %p399 = pneg %p42
      %p400 = pneg %p66
      %p401 = pneg %p63
      %p402 = pneg %p87
      %p403 = pneg %p84
      %p404 = pneg %p108
      %p405 = pneg %p105
      %p406 = pneg %p129
      %p407 = pneg %p126
      %p408 = pneg %p150
      %p409 = pneg %p147
      %p410 = pneg %p171
      %p411 = pneg %p168
      %p412 = pneg %p192
      %p413 = pneg %p189
      %p414 = pneg %p213
      %p415 = pneg %p210
      %p416 = pneg %p234
      %p417 = pneg %p231
      %p418 = pneg %p255
      %p419 = pneg %p252
      %p420 = pneg %p276
      %p421 = pneg %p273
      %p422 = pneg %p297
      %p423 = pneg %p294
      %p424 = pneg %p323
      %p425 = pneg %p320
      %p426 = scmp.lt.s32.totalorder %s24, 1
      %s427 = scalar_select %p426, %s24, 1
      %s428 = scalar_lea.vmem %s13, %s427
      %p429 = scmp.lt.s32.totalorder %s24, 1
      %s430 = scalar_select %p429, %s24, 1
      %s431 = smul.addr %s430, 6
      %s432 = smul.addr %s431, 8
      %s433 = scalar_lea.vmem %s0, %s432
      %p434 = scmp.lt.s32.totalorder %s24, 1
      %s435 = scalar_select %p434, %s24, 1
      %s436 = scalar_lea.vmem %s13, %s435
      %v438 = vld [vmem:[%s433] sm:$0xff]
      %v439 = vld [vmem:[%s433 + $0x8] sm:$0xff]
      %v440 = vld [vmem:[%s433 + $0x10] sm:$0xff]
      %v441 = vld [vmem:[%s433 + $0x18] sm:$0xff]
      %v442 = vld [vmem:[%s433 + $0x20] sm:$0xff]
      %v443 = vld [vmem:[%s433 + $0x28] sm:$0xff]
      %v444 = vld [vmem:[%s1] sm:$0xf]
      %v445 = vpack.c.bf16 %v438, %v438
      %v446 = vpack.c.bf16 %v439, %v439
      %v447 = vpack.c.bf16 %v440, %v440
      %v448 = vpack.c.bf16 %v441, %v441
      %v449 = vpack.c.bf16 %v442, %v442
      %v450 = vpack.c.bf16 %v443, %v443
      %vm451 = vcmask 64512
      %v453 = vsel %vm451, %v444, 0
      %vm455 = vcmask 1043456
      %v457 = vsel %vm455, %v445, 0
      %459 = vmatprep.subr.bf16.mxu0 0
      %460 = vmatpush1.bf16.msra.mxu0 0
      %461 = vmatprep.subr.bf16.mxu0 0
      %462 = vmatpush1.bf16.msra.mxu0 0
      %463 = vmatprep.subr.bf16.mxu0 0
      %464 = vmatpush1.bf16.msra.mxu0 0
      %465 = vmatprep.subr.bf16.mxu0 0
      %466 = vmatpush1.bf16.msra.mxu0 0
      %467 = vmatprep.subr.bf16.mxu0 0
      %468 = vmatpush1.bf16.msra.mxu0 0
      %469 = vmatprep.subr.bf16.mxu0 0
      %470 = vmatpush1.bf16.msra.mxu0 0
      %471 = vmatprep.subr.bf16.mxu0 0
      %472 = vmatpush1.bf16.msra.mxu0 0
      %473 = vmatprep.subr.bf16.mxu0 0
      %474 = vmatpush1.bf16.msra.mxu0 %v457
      %475 = vmatprep.subr.bf16.mxu0 0
      %476 = vmatpush2.bf16.msra.mxu0 0
      %477 = vmatprep.subr.bf16.mxu0 0
      %478 = vmatpush2.bf16.msra.mxu0 0
      %479 = vmatprep.subr.bf16.mxu0 0
      %480 = vmatpush2.bf16.msra.mxu0 0
      %481 = vmatprep.subr.bf16.mxu0 0
      %482 = vmatpush2.bf16.msra.mxu0 0
      %483 = vmatprep.subr.bf16.mxu0 0
      %484 = vmatpush2.bf16.msra.mxu0 0
      %485 = vmatprep.subr.bf16.mxu0 0
      %486 = vmatpush2.bf16.msra.mxu0 0
      %487 = vmatprep.subr.bf16.mxu0 0
      %488 = vmatpush2.bf16.msra.mxu0 0
      %489 = vmatprep.subr.bf16.mxu0 0
      %490 = vmatpush2.bf16.msra.mxu0 0
      %491 = vmatprep.mubr.bf16.mxu0 0
      %492 = vmatmul.mubr.bf16.gmra.mxu0 %v453
      %v493 = vpop.f32.mrf.mxu0
      %v494 = vadd.f32 0.0, %v493
      %v495 = vpop.f32.mrf.mxu0
      %v496 = vpop.f32.mrf.mxu0
      %v497 = vpop.f32.mrf.mxu0
      %498 = vdwg.mxu0
      %v500 = vsel %vm455, %v446, 0
      %502 = vmatprep.subr.bf16.mxu0 0
      %503 = vmatpush1.bf16.msra.mxu0 0
      %504 = vmatprep.subr.bf16.mxu0 0
      %505 = vmatpush1.bf16.msra.mxu0 0
      %506 = vmatprep.subr.bf16.mxu0 0
      %507 = vmatpush1.bf16.msra.mxu0 0
      %508 = vmatprep.subr.bf16.mxu0 0
      %509 = vmatpush1.bf16.msra.mxu0 0
      %510 = vmatprep.subr.bf16.mxu0 0
      %511 = vmatpush1.bf16.msra.mxu0 0
      %512 = vmatprep.subr.bf16.mxu0 0
      %513 = vmatpush1.bf16.msra.mxu0 0
      %514 = vmatprep.subr.bf16.mxu0 0
      %515 = vmatpush1.bf16.msra.mxu0 0
      %516 = vmatprep.subr.bf16.mxu0 0
      %517 = vmatpush1.bf16.msra.mxu0 %v500
      %518 = vmatprep.subr.bf16.mxu0 0
      %519 = vmatpush2.bf16.msra.mxu0 0
      %520 = vmatprep.subr.bf16.mxu0 0
      %521 = vmatpush2.bf16.msra.mxu0 0
      %522 = vmatprep.subr.bf16.mxu0 0
      %523 = vmatpush2.bf16.msra.mxu0 0
      %524 = vmatprep.subr.bf16.mxu0 0
      %525 = vmatpush2.bf16.msra.mxu0 0
      %526 = vmatprep.subr.bf16.mxu0 0
      %527 = vmatpush2.bf16.msra.mxu0 0
      %528 = vmatprep.subr.bf16.mxu0 0
      %529 = vmatpush2.bf16.msra.mxu0 0
      %530 = vmatprep.subr.bf16.mxu0 0
      %531 = vmatpush2.bf16.msra.mxu0 0
      %532 = vmatprep.subr.bf16.mxu0 0
      %533 = vmatpush2.bf16.msra.mxu0 0
      %534 = vmatprep.mubr.bf16.mxu0 0
      %535 = vmatmul.mubr.bf16.gmra.mxu0 %v453
      %v536 = vpop.f32.mrf.mxu0
      %v537 = vadd.f32 0.0, %v536
      %v538 = vpop.f32.mrf.mxu0
      %v539 = vpop.f32.mrf.mxu0
      %v540 = vpop.f32.mrf.mxu0
      %541 = vdwg.mxu0
      %v543 = vsel %vm455, %v447, 0
      %545 = vmatprep.subr.bf16.mxu0 0
      %546 = vmatpush1.bf16.msra.mxu0 0
      %547 = vmatprep.subr.bf16.mxu0 0
      %548 = vmatpush1.bf16.msra.mxu0 0
      %549 = vmatprep.subr.bf16.mxu0 0
      %550 = vmatpush1.bf16.msra.mxu0 0
      %551 = vmatprep.subr.bf16.mxu0 0
      %552 = vmatpush1.bf16.msra.mxu0 0
      %553 = vmatprep.subr.bf16.mxu0 0
      %554 = vmatpush1.bf16.msra.mxu0 0
      %555 = vmatprep.subr.bf16.mxu0 0
      %556 = vmatpush1.bf16.msra.mxu0 0
      %557 = vmatprep.subr.bf16.mxu0 0
      %558 = vmatpush1.bf16.msra.mxu0 0
      %559 = vmatprep.subr.bf16.mxu0 0
      %560 = vmatpush1.bf16.msra.mxu0 %v543
      %561 = vmatprep.subr.bf16.mxu0 0
      %562 = vmatpush2.bf16.msra.mxu0 0
      %563 = vmatprep.subr.bf16.mxu0 0
      %564 = vmatpush2.bf16.msra.mxu0 0
      %565 = vmatprep.subr.bf16.mxu0 0
      %566 = vmatpush2.bf16.msra.mxu0 0
      %567 = vmatprep.subr.bf16.mxu0 0
      %568 = vmatpush2.bf16.msra.mxu0 0
      %569 = vmatprep.subr.bf16.mxu0 0
      %570 = vmatpush2.bf16.msra.mxu0 0
      %571 = vmatprep.subr.bf16.mxu0 0
      %572 = vmatpush2.bf16.msra.mxu0 0
      %573 = vmatprep.subr.bf16.mxu0 0
      %574 = vmatpush2.bf16.msra.mxu0 0
      %575 = vmatprep.subr.bf16.mxu0 0
      %576 = vmatpush2.bf16.msra.mxu0 0
      %577 = vmatprep.mubr.bf16.mxu0 0
      %578 = vmatmul.mubr.bf16.gmra.mxu0 %v453
      %v579 = vpop.f32.mrf.mxu0
      %v580 = vadd.f32 0.0, %v579
      %v581 = vpop.f32.mrf.mxu0
      %v582 = vpop.f32.mrf.mxu0
      %v583 = vpop.f32.mrf.mxu0
      %584 = vdwg.mxu0
      %v586 = vsel %vm455, %v448, 0
      %588 = vmatprep.subr.bf16.mxu0 0
      %589 = vmatpush1.bf16.msra.mxu0 0
      %590 = vmatprep.subr.bf16.mxu0 0
      %591 = vmatpush1.bf16.msra.mxu0 0
      %592 = vmatprep.subr.bf16.mxu0 0
      %593 = vmatpush1.bf16.msra.mxu0 0
      %594 = vmatprep.subr.bf16.mxu0 0
      %595 = vmatpush1.bf16.msra.mxu0 0
      %596 = vmatprep.subr.bf16.mxu0 0
      %597 = vmatpush1.bf16.msra.mxu0 0
      %598 = vmatprep.subr.bf16.mxu0 0
      %599 = vmatpush1.bf16.msra.mxu0 0
      %600 = vmatprep.subr.bf16.mxu0 0
      %601 = vmatpush1.bf16.msra.mxu0 0
      %602 = vmatprep.subr.bf16.mxu0 0
      %603 = vmatpush1.bf16.msra.mxu0 %v586
      %604 = vmatprep.subr.bf16.mxu0 0
      %605 = vmatpush2.bf16.msra.mxu0 0
      %606 = vmatprep.subr.bf16.mxu0 0
      %607 = vmatpush2.bf16.msra.mxu0 0
      %608 = vmatprep.subr.bf16.mxu0 0
      %609 = vmatpush2.bf16.msra.mxu0 0
      %610 = vmatprep.subr.bf16.mxu0 0
      %611 = vmatpush2.bf16.msra.mxu0 0
      %612 = vmatprep.subr.bf16.mxu0 0
      %613 = vmatpush2.bf16.msra.mxu0 0
      %614 = vmatprep.subr.bf16.mxu0 0
      %615 = vmatpush2.bf16.msra.mxu0 0
      %616 = vmatprep.subr.bf16.mxu0 0
      %617 = vmatpush2.bf16.msra.mxu0 0
      %618 = vmatprep.subr.bf16.mxu0 0
      %619 = vmatpush2.bf16.msra.mxu0 0
      %620 = vmatprep.mubr.bf16.mxu0 0
      %621 = vmatmul.mubr.bf16.gmra.mxu0 %v453
      %v622 = vpop.f32.mrf.mxu0
      %v623 = vadd.f32 0.0, %v622
      %v624 = vpop.f32.mrf.mxu0
      %v625 = vpop.f32.mrf.mxu0
      %v626 = vpop.f32.mrf.mxu0
      %627 = vdwg.mxu0
      %v629 = vsel %vm455, %v449, 0
      %631 = vmatprep.subr.bf16.mxu0 0
      %632 = vmatpush1.bf16.msra.mxu0 0
      %633 = vmatprep.subr.bf16.mxu0 0
      %634 = vmatpush1.bf16.msra.mxu0 0
      %635 = vmatprep.subr.bf16.mxu0 0
      %636 = vmatpush1.bf16.msra.mxu0 0
      %637 = vmatprep.subr.bf16.mxu0 0
      %638 = vmatpush1.bf16.msra.mxu0 0
      %639 = vmatprep.subr.bf16.mxu0 0
      %640 = vmatpush1.bf16.msra.mxu0 0
      %641 = vmatprep.subr.bf16.mxu0 0
      %642 = vmatpush1.bf16.msra.mxu0 0
      %643 = vmatprep.subr.bf16.mxu0 0
      %644 = vmatpush1.bf16.msra.mxu0 0
      %645 = vmatprep.subr.bf16.mxu0 0
      %646 = vmatpush1.bf16.msra.mxu0 %v629
      %647 = vmatprep.subr.bf16.mxu0 0
      %648 = vmatpush2.bf16.msra.mxu0 0
      %649 = vmatprep.subr.bf16.mxu0 0
      %650 = vmatpush2.bf16.msra.mxu0 0
      %651 = vmatprep.subr.bf16.mxu0 0
      %652 = vmatpush2.bf16.msra.mxu0 0
      %653 = vmatprep.subr.bf16.mxu0 0
      %654 = vmatpush2.bf16.msra.mxu0 0
      %655 = vmatprep.subr.bf16.mxu0 0
      %656 = vmatpush2.bf16.msra.mxu0 0
      %657 = vmatprep.subr.bf16.mxu0 0
      %658 = vmatpush2.bf16.msra.mxu0 0
      %659 = vmatprep.subr.bf16.mxu0 0
      %660 = vmatpush2.bf16.msra.mxu0 0
      %661 = vmatprep.subr.bf16.mxu0 0
      %662 = vmatpush2.bf16.msra.mxu0 0
      %663 = vmatprep.mubr.bf16.mxu0 0
      %664 = vmatmul.mubr.bf16.gmra.mxu0 %v453
      %v665 = vpop.f32.mrf.mxu0
      %v666 = vadd.f32 0.0, %v665
      %v667 = vpop.f32.mrf.mxu0
      %v668 = vpop.f32.mrf.mxu0
      %v669 = vpop.f32.mrf.mxu0
      %670 = vdwg.mxu0
      %v672 = vsel %vm455, %v450, 0
      %674 = vmatprep.subr.bf16.mxu0 0
      %675 = vmatpush1.bf16.msra.mxu0 0
      %676 = vmatprep.subr.bf16.mxu0 0
      %677 = vmatpush1.bf16.msra.mxu0 0
      %678 = vmatprep.subr.bf16.mxu0 0
      %679 = vmatpush1.bf16.msra.mxu0 0
      %680 = vmatprep.subr.bf16.mxu0 0
      %681 = vmatpush1.bf16.msra.mxu0 0
      %682 = vmatprep.subr.bf16.mxu0 0
      %683 = vmatpush1.bf16.msra.mxu0 0
      %684 = vmatprep.subr.bf16.mxu0 0
      %685 = vmatpush1.bf16.msra.mxu0 0
      %686 = vmatprep.subr.bf16.mxu0 0
      %687 = vmatpush1.bf16.msra.mxu0 0
      %688 = vmatprep.subr.bf16.mxu0 0
      %689 = vmatpush1.bf16.msra.mxu0 %v672
      %690 = vmatprep.subr.bf16.mxu0 0
      %691 = vmatpush2.bf16.msra.mxu0 0
      %692 = vmatprep.subr.bf16.mxu0 0
      %693 = vmatpush2.bf16.msra.mxu0 0
      %694 = vmatprep.subr.bf16.mxu0 0
      %695 = vmatpush2.bf16.msra.mxu0 0
      %696 = vmatprep.subr.bf16.mxu0 0
      %697 = vmatpush2.bf16.msra.mxu0 0
      %698 = vmatprep.subr.bf16.mxu0 0
      %699 = vmatpush2.bf16.msra.mxu0 0
      %700 = vmatprep.subr.bf16.mxu0 0
      %701 = vmatpush2.bf16.msra.mxu0 0
      %702 = vmatprep.subr.bf16.mxu0 0
      %703 = vmatpush2.bf16.msra.mxu0 0
      %704 = vmatprep.subr.bf16.mxu0 0
      %705 = vmatpush2.bf16.msra.mxu0 0
      %706 = vmatprep.mubr.bf16.mxu0 0
      %707 = vmatmul.mubr.bf16.gmra.mxu0 %v453
      %v708 = vpop.f32.mrf.mxu0
      %v709 = vadd.f32 0.0, %v708
      %v710 = vpop.f32.mrf.mxu0
      %v711 = vpop.f32.mrf.mxu0
      %v712 = vpop.f32.mrf.mxu0
      %713 = vdwg.mxu0
      %720 = vrot.lane.b32.xlu0 %v494, 4
      %v721 = vpop.permute.xlu0 %720
      %722 = vrot.lane.b32.xlu0 %v537, 4
      %v723 = vpop.permute.xlu0 %722
      %724 = vrot.lane.b32.xlu0 %v580, 4
      %v725 = vpop.permute.xlu0 %724
      %726 = vrot.lane.b32.xlu0 %v623, 4
      %v727 = vpop.permute.xlu0 %726
      %728 = vrot.lane.b32.xlu0 %v666, 4
      %v729 = vpop.permute.xlu0 %728
      %730 = vrot.lane.b32.xlu0 %v709, 4
      %v731 = vpop.permute.xlu0 %730
      %vm738 = vcmask 31744
      %v739 = vsel %vm738, %v438, %v721
      %v740 = vsel %vm738, %v439, %v723
      %v741 = vsel %vm738, %v440, %v725
      %v742 = vsel %vm738, %v441, %v727
      %v743 = vsel %vm738, %v442, %v729
      %v744 = vsel %vm738, %v443, %v731
      %v745 = vpack.c.bf16 %v740, %v739
      %v746 = vpack.c.bf16 %v742, %v741
      %v747 = vpack.c.bf16 %v744, %v743
      %v748 = vld [vmem:[%s3] sm:$0xf]
      %v749 = vld [vmem:[%s6] sm:$0x1]
      %v751 = vlaneseq
      %v752 = vshrl.u32 %v751, 7
      %v753 = vsub.s32 0, %v752
      %v754 = vrot.slane %v749, %v753
      %v757 = vsel %vm451, %v745, 0
      %v760 = vsel %vm451, %v746, 0
      %v763 = vsel %vm451, %v747, 0
      %v766 = vsel %vm455, %v748, 0
      %768 = vmatprep.subr.bf16.mxu0 0
      %769 = vmatpush1.bf16.msra.mxu0 0
      %770 = vmatprep.subr.bf16.mxu0 0
      %771 = vmatpush1.bf16.msra.mxu0 0
      %772 = vmatprep.subr.bf16.mxu0 0
      %773 = vmatpush1.bf16.msra.mxu0 0
      %774 = vmatprep.subr.bf16.mxu0 0
      %775 = vmatpush1.bf16.msra.mxu0 0
      %776 = vmatprep.subr.bf16.mxu0 0
      %777 = vmatpush1.bf16.msra.mxu0 0
      %778 = vmatprep.subr.bf16.mxu0 0
      %779 = vmatpush1.bf16.msra.mxu0 0
      %780 = vmatprep.subr.bf16.mxu0 0
      %781 = vmatpush1.bf16.msra.mxu0 0
      %782 = vmatprep.subr.bf16.mxu0 0
      %783 = vmatpush1.bf16.msra.mxu0 %v766
      %784 = vmatprep.subr.bf16.mxu0 0
      %785 = vmatpush2.bf16.msra.mxu0 0
      %786 = vmatprep.subr.bf16.mxu0 0
      %787 = vmatpush2.bf16.msra.mxu0 0
      %788 = vmatprep.subr.bf16.mxu0 0
      %789 = vmatpush2.bf16.msra.mxu0 0
      %790 = vmatprep.subr.bf16.mxu0 0
      %791 = vmatpush2.bf16.msra.mxu0 0
      %792 = vmatprep.subr.bf16.mxu0 0
      %793 = vmatpush2.bf16.msra.mxu0 0
      %794 = vmatprep.subr.bf16.mxu0 0
      %795 = vmatpush2.bf16.msra.mxu0 0
      %796 = vmatprep.subr.bf16.mxu0 0
      %797 = vmatpush2.bf16.msra.mxu0 0
      %798 = vmatprep.subr.bf16.mxu0 0
      %799 = vmatpush2.bf16.msra.mxu0 0
      %800 = vmatprep.mubr.bf16.mxu0 0
      %801 = vmatmul.mubr.bf16.gmra.mxu0 %v757
      %v802 = vpop.f32.mrf.mxu0
      %v803 = vadd.f32 %v754, %v802
      %v804 = vpop.f32.mrf.mxu0
      %v805 = vpop.f32.mrf.mxu0
      %v806 = vadd.f32 %v754, %v805
      %v807 = vpop.f32.mrf.mxu0
      %808 = vmatprep.mubr.bf16.mxu0 0
      %809 = vmatmul.mubr.bf16.gmra.mxu0 %v760
      %v810 = vpop.f32.mrf.mxu0
      %v811 = vadd.f32 %v754, %v810
      %v812 = vpop.f32.mrf.mxu0
      %v813 = vpop.f32.mrf.mxu0
      %v814 = vadd.f32 %v754, %v813
      %v815 = vpop.f32.mrf.mxu0
      %816 = vmatprep.mubr.bf16.mxu0 0
      %817 = vmatmul.mubr.bf16.gmra.mxu0 %v763
      %v818 = vpop.f32.mrf.mxu0
      %v819 = vadd.f32 %v754, %v818
      %v820 = vpop.f32.mrf.mxu0
      %v821 = vpop.f32.mrf.mxu0
      %v822 = vadd.f32 %v754, %v821
      %v823 = vpop.f32.mrf.mxu0
      %824 = vdwg.mxu0
      %vm825 = vcmask 261120
      %826 = vst.msk [vmem:[#allocation2] sm:$0xff] %vm825, %v803
      %827 = vst.msk [vmem:[#allocation2 + $0x8] sm:$0xff] %vm825, %v806
      %828 = vst.msk [vmem:[#allocation2 + $0x10] sm:$0xff] %vm825, %v811
      %829 = vst.msk [vmem:[#allocation2 + $0x18] sm:$0xff] %vm825, %v814
      %830 = vst.msk [vmem:[#allocation2 + $0x20] sm:$0xff] %vm825, %v819
      %831 = vst.msk [vmem:[#allocation2 + $0x28] sm:$0xff] %vm825, %v822
      %838 = vrot.lane.b32.xlu0 %v803, 96
      %v839 = vpop.permute.xlu0 %838
      %840 = vrot.lane.b32.xlu0 %v806, 96
      %v841 = vpop.permute.xlu0 %840
      %842 = vrot.lane.b32.xlu0 %v811, 96
      %v843 = vpop.permute.xlu0 %842
      %844 = vrot.lane.b32.xlu0 %v814, 96
      %v845 = vpop.permute.xlu0 %844
      %846 = vrot.lane.b32.xlu0 %v819, 96
      %v847 = vpop.permute.xlu0 %846
      %848 = vrot.lane.b32.xlu0 %v822, 96
      %v849 = vpop.permute.xlu0 %848
      %856 = vst.msk [vmem:[#allocation3] sm:$0xff] %vm825, %v839
      %857 = vst.msk [vmem:[#allocation3 + $0x8] sm:$0xff] %vm825, %v841
      %858 = vst.msk [vmem:[#allocation3 + $0x10] sm:$0xff] %vm825, %v843
      %859 = vst.msk [vmem:[#allocation3 + $0x18] sm:$0xff] %vm825, %v845
      %860 = vst.msk [vmem:[#allocation3 + $0x20] sm:$0xff] %vm825, %v847
      %861 = vst.msk [vmem:[#allocation3 + $0x28] sm:$0xff] %vm825, %v849
      %862 = vrot.lane.b32.xlu0 %v803, 64
      %v863 = vpop.permute.xlu0 %862
      %864 = vrot.lane.b32.xlu0 %v806, 64
      %v865 = vpop.permute.xlu0 %864
      %866 = vrot.lane.b32.xlu0 %v811, 64
      %v867 = vpop.permute.xlu0 %866
      %868 = vrot.lane.b32.xlu0 %v814, 64
      %v869 = vpop.permute.xlu0 %868
      %870 = vrot.lane.b32.xlu0 %v819, 64
      %v871 = vpop.permute.xlu0 %870
      %872 = vrot.lane.b32.xlu0 %v822, 64
      %v873 = vpop.permute.xlu0 %872
      %880 = vst.msk [vmem:[#allocation4] sm:$0xff] %vm825, %v863
      %881 = vst.msk [vmem:[#allocation4 + $0x8] sm:$0xff] %vm825, %v865
      %882 = vst.msk [vmem:[#allocation4 + $0x10] sm:$0xff] %vm825, %v867
      %883 = vst.msk [vmem:[#allocation4 + $0x18] sm:$0xff] %vm825, %v869
      %884 = vst.msk [vmem:[#allocation4 + $0x20] sm:$0xff] %vm825, %v871
      %885 = vst.msk [vmem:[#allocation4 + $0x28] sm:$0xff] %vm825, %v873
      %v886 = vld [vmem:[%s2] sm:$0x1]
      %v888 = vlaneseq
      %v889 = vshrl.u32 %v888, 7
      %v890 = vsub.s32 0, %v889
      %v891 = vrot.slane %v886, %v890
      loop: start=0, step=1, limit=6
      $region73: #{tpu_custom_call.1} parent=71 // loop_pre_header
        _
      $region74: #{tpu_custom_call.1} parent=71 // loop_header
        %s894 = sphi 0, %s898
        %p895 = scmp.ge.s32.totalorder %s894, 6
        %v899 = vphi %v891, %v1186
      $region75: #{tpu_custom_call.1} parent=71 // loop_header_branch
        %897 = sbr.rel (%p895) target = $region79
      $region76: #{tpu_custom_call.1} parent=71 // loop_body
        %v900 = vld [vmem:[%s1] sm:$0xf]
        %s901 = smul.u32 %s894, 8
        %s902 = scalar_lea.vmem [#allocation2], %s901
        %v903 = vld [vmem:[%s902] sm:$0xff]
        %s904 = scalar_lea.vmem [#allocation3], %s901
        %v905 = vld [vmem:[%s904] sm:$0xff]
        %s906 = scalar_lea.vmem [#allocation4], %s901
        %v907 = vld [vmem:[%s906] sm:$0xff]
        %v908 = vpack.c.bf16 %v899, %v899
        %v910 = vsel %vm451, %v900, 0
        %v913 = vsel %vm455, %v908, 0
        %915 = vmatprep.subr.bf16.mxu0 0
        %916 = vmatpush1.bf16.msra.mxu0 0
        %917 = vmatprep.subr.bf16.mxu0 0
        %918 = vmatpush1.bf16.msra.mxu0 0
        %919 = vmatprep.subr.bf16.mxu0 0
        %920 = vmatpush1.bf16.msra.mxu0 0
        %921 = vmatprep.subr.bf16.mxu0 0
        %922 = vmatpush1.bf16.msra.mxu0 0
        %923 = vmatprep.subr.bf16.mxu0 0
        %924 = vmatpush1.bf16.msra.mxu0 0
        %925 = vmatprep.subr.bf16.mxu0 0
        %926 = vmatpush1.bf16.msra.mxu0 0
        %927 = vmatprep.subr.bf16.mxu0 0
        %928 = vmatpush1.bf16.msra.mxu0 0
        %929 = vmatprep.subr.bf16.mxu0 0
        %930 = vmatpush1.bf16.msra.mxu0 %v913
        %931 = vmatprep.subr.bf16.mxu0 0
        %932 = vmatpush2.bf16.msra.mxu0 0
        %933 = vmatprep.subr.bf16.mxu0 0
        %934 = vmatpush2.bf16.msra.mxu0 0
        %935 = vmatprep.subr.bf16.mxu0 0
        %936 = vmatpush2.bf16.msra.mxu0 0
        %937 = vmatprep.subr.bf16.mxu0 0
        %938 = vmatpush2.bf16.msra.mxu0 0
        %939 = vmatprep.subr.bf16.mxu0 0
        %940 = vmatpush2.bf16.msra.mxu0 0
        %941 = vmatprep.subr.bf16.mxu0 0
        %942 = vmatpush2.bf16.msra.mxu0 0
        %943 = vmatprep.subr.bf16.mxu0 0
        %944 = vmatpush2.bf16.msra.mxu0 0
        %945 = vmatprep.subr.bf16.mxu0 0
        %946 = vmatpush2.bf16.msra.mxu0 0
        %947 = vmatprep.mubr.bf16.mxu0 0
        %948 = vmatmul.mubr.bf16.gmra.mxu0 %v910
        %v949 = vpop.f32.mrf.mxu0
        %v950 = vadd.f32 0.0, %v949
        %v951 = vpop.f32.mrf.mxu0
        %v952 = vpop.f32.mrf.mxu0
        %v953 = vpop.f32.mrf.mxu0
        %954 = vdwg.mxu0
        %956 = vrot.lane.b32.xlu0 %v950, 32
        %v957 = vpop.permute.xlu0 %956
        %v959 = vsel %vm825, %v899, %v957
        %v960 = vpack.c.bf16 %v959, %v959
        %v961 = vld [vmem:[%s4] sm:$0xf]
        %v962 = vld [vmem:[%s4 + $0x4] sm:$0xf]
        %v963 = vld [vmem:[%s4 + $0x8] sm:$0xf]
        %v964 = vld [vmem:[%s4 + $0xc] sm:$0xf]
        %v965 = vld [vmem:[%s4 + $0x10] sm:$0xf]
        %v966 = vld [vmem:[%s4 + $0x14] sm:$0xf]
        %v967 = vld [vmem:[%s4 + $0x18] sm:$0xf]
        %v968 = vld [vmem:[%s4 + $0x1c] sm:$0xf]
        %v977 = vunpack.c.l.b16 %v961
        %v978 = vunpack.c.l.b16 %v962
        %v979 = vunpack.c.l.b16 %v963
        %v980 = vunpack.c.l.b16 %v964
        %v981 = vunpack.c.l.b16 %v965
        %v982 = vunpack.c.l.b16 %v966
        %v983 = vunpack.c.l.b16 %v967
        %v984 = vunpack.c.l.b16 %v968
        %v985 = vpack.c.b16 %v978, %v977
        %v986 = vpack.c.b16 %v980, %v979
        %v987 = vpack.c.b16 %v982, %v981
        %v988 = vpack.c.b16 %v984, %v983
        %vm993 = vcmask 523264
        %v995 = vsel %vm993, %v960, 0
        %997 = vmatprep.subr.bf16.mxu0 0
        %998 = vmatpush1.bf16.msra.mxu0 0
        %999 = vmatprep.subr.bf16.mxu0 0
        %1000 = vmatpush1.bf16.msra.mxu0 0
        %1001 = vmatprep.subr.bf16.mxu0 0
        %1002 = vmatpush1.bf16.msra.mxu0 0
        %1003 = vmatprep.subr.bf16.mxu0 0
        %1004 = vmatpush1.bf16.msra.mxu0 0
        %1005 = vmatprep.subr.bf16.mxu0 0
        %1006 = vmatpush1.bf16.msra.mxu0 %v988
        %1007 = vmatprep.subr.bf16.mxu0 0
        %1008 = vmatpush1.bf16.msra.mxu0 %v987
        %1009 = vmatprep.subr.bf16.mxu0 0
        %1010 = vmatpush1.bf16.msra.mxu0 %v986
        %1011 = vmatprep.subr.bf16.mxu0 0
        %1012 = vmatpush1.bf16.msra.mxu0 %v985
        %1013 = vmatprep.subr.bf16.mxu0 0
        %1014 = vmatpush2.bf16.msra.mxu0 0
        %1015 = vmatprep.subr.bf16.mxu0 0
        %1016 = vmatpush2.bf16.msra.mxu0 0
        %1017 = vmatprep.subr.bf16.mxu0 0
        %1018 = vmatpush2.bf16.msra.mxu0 0
        %1019 = vmatprep.subr.bf16.mxu0 0
        %1020 = vmatpush2.bf16.msra.mxu0 0
        %1021 = vmatprep.subr.bf16.mxu0 0
        %1022 = vmatpush2.bf16.msra.mxu0 0
        %1023 = vmatprep.subr.bf16.mxu0 0
        %1024 = vmatpush2.bf16.msra.mxu0 0
        %1025 = vmatprep.subr.bf16.mxu0 0
        %1026 = vmatpush2.bf16.msra.mxu0 0
        %1027 = vmatprep.subr.bf16.mxu0 0
        %1028 = vmatpush2.bf16.msra.mxu0 0
        %1029 = vmatprep.mubr.bf16.mxu0 0
        %1030 = vmatmul.mubr.bf16.gmra.mxu0 %v995
        %v1031 = vpop.f32.mrf.mxu0
        %v1032 = vadd.f32 0.0, %v1031
        %v1033 = vpop.f32.mrf.mxu0
        %v1034 = vpop.f32.mrf.mxu0
        %v1035 = vpop.f32.mrf.mxu0
        %1036 = vdwg.mxu0
        %v1037 = vadd.f32 %v903, %v1032
        %v1038 = vxor.u32 %v1037, 2147483648
        %v1039 = vmul.f32 %v1038, 1.442695
        %v1040 = vpow.pop %v1039
        %v1041 = vadd.f32 %v1040, 1.0
        %v1042 = vrcp.pop %v1041
        %v1043 = vmul.f32 1.0, %v1042
        %1045 = vrot.lane.b32.xlu0 %v1032, 96
        %v1046 = vpop.permute.xlu0 %1045
        %v1048 = vadd.f32 %v905, %v1046
        %v1049 = vxor.u32 %v1048, 2147483648
        %v1050 = vmul.f32 %v1049, 1.442695
        %v1051 = vpow.pop %v1050
        %v1052 = vadd.f32 %v1051, 1.0
        %v1053 = vrcp.pop %v1052
        %v1054 = vmul.f32 1.0, %v1053
        %v1055 = vmul.f32 %v1054, %v899
        %v1056 = vpack.c.bf16 %v1055, %v1055
        %v1058 = vsel %vm455, %v1056, 0
        %1060 = vmatprep.subr.bf16.mxu0 0
        %1061 = vmatpush1.bf16.msra.mxu0 0
        %1062 = vmatprep.subr.bf16.mxu0 0
        %1063 = vmatpush1.bf16.msra.mxu0 0
        %1064 = vmatprep.subr.bf16.mxu0 0
        %1065 = vmatpush1.bf16.msra.mxu0 0
        %1066 = vmatprep.subr.bf16.mxu0 0
        %1067 = vmatpush1.bf16.msra.mxu0 0
        %1068 = vmatprep.subr.bf16.mxu0 0
        %1069 = vmatpush1.bf16.msra.mxu0 0
        %1070 = vmatprep.subr.bf16.mxu0 0
        %1071 = vmatpush1.bf16.msra.mxu0 0
        %1072 = vmatprep.subr.bf16.mxu0 0
        %1073 = vmatpush1.bf16.msra.mxu0 0
        %1074 = vmatprep.subr.bf16.mxu0 0
        %1075 = vmatpush1.bf16.msra.mxu0 %v1058
        %1076 = vmatprep.subr.bf16.mxu0 0
        %1077 = vmatpush2.bf16.msra.mxu0 0
        %1078 = vmatprep.subr.bf16.mxu0 0
        %1079 = vmatpush2.bf16.msra.mxu0 0
        %1080 = vmatprep.subr.bf16.mxu0 0
        %1081 = vmatpush2.bf16.msra.mxu0 0
        %1082 = vmatprep.subr.bf16.mxu0 0
        %1083 = vmatpush2.bf16.msra.mxu0 0
        %1084 = vmatprep.subr.bf16.mxu0 0
        %1085 = vmatpush2.bf16.msra.mxu0 0
        %1086 = vmatprep.subr.bf16.mxu0 0
        %1087 = vmatpush2.bf16.msra.mxu0 0
        %1088 = vmatprep.subr.bf16.mxu0 0
        %1089 = vmatpush2.bf16.msra.mxu0 0
        %1090 = vmatprep.subr.bf16.mxu0 0
        %1091 = vmatpush2.bf16.msra.mxu0 0
        %1092 = vmatprep.mubr.bf16.mxu0 0
        %1093 = vmatmul.mubr.bf16.gmra.mxu0 %v910
        %v1094 = vpop.f32.mrf.mxu0
        %v1095 = vadd.f32 0.0, %v1094
        %v1096 = vpop.f32.mrf.mxu0
        %v1097 = vpop.f32.mrf.mxu0
        %v1098 = vpop.f32.mrf.mxu0
        %1099 = vdwg.mxu0
        %1101 = vrot.lane.b32.xlu0 %v1095, 32
        %v1102 = vpop.permute.xlu0 %1101
        %v1104 = vsel %vm825, %v1055, %v1102
        %v1105 = vpack.c.bf16 %v1104, %v1104
        %v1106 = vld [vmem:[%s5] sm:$0xf]
        %v1107 = vld [vmem:[%s5 + $0x4] sm:$0xf]
        %v1108 = vld [vmem:[%s5 + $0x8] sm:$0xf]
        %v1109 = vld [vmem:[%s5 + $0xc] sm:$0xf]
        %v1110 = vld [vmem:[%s5 + $0x10] sm:$0xf]
        %v1111 = vld [vmem:[%s5 + $0x14] sm:$0xf]
        %v1112 = vld [vmem:[%s5 + $0x18] sm:$0xf]
        %v1113 = vld [vmem:[%s5 + $0x1c] sm:$0xf]
        %v1122 = vunpack.c.l.b16 %v1106
        %v1123 = vunpack.c.l.b16 %v1107
        %v1124 = vunpack.c.l.b16 %v1108
        %v1125 = vunpack.c.l.b16 %v1109
        %v1126 = vunpack.c.l.b16 %v1110
        %v1127 = vunpack.c.l.b16 %v1111
        %v1128 = vunpack.c.l.b16 %v1112
        %v1129 = vunpack.c.l.b16 %v1113
        %v1130 = vpack.c.b16 %v1123, %v1122
        %v1131 = vpack.c.b16 %v1125, %v1124
        %v1132 = vpack.c.b16 %v1127, %v1126
        %v1133 = vpack.c.b16 %v1129, %v1128
        %v1139 = vsel %vm993, %v1105, 0
        %1141 = vmatprep.subr.bf16.mxu0 0
        %1142 = vmatpush1.bf16.msra.mxu0 0
        %1143 = vmatprep.subr.bf16.mxu0 0
        %1144 = vmatpush1.bf16.msra.mxu0 0
        %1145 = vmatprep.subr.bf16.mxu0 0
        %1146 = vmatpush1.bf16.msra.mxu0 0
        %1147 = vmatprep.subr.bf16.mxu0 0
        %1148 = vmatpush1.bf16.msra.mxu0 0
        %1149 = vmatprep.subr.bf16.mxu0 0
        %1150 = vmatpush1.bf16.msra.mxu0 %v1133
        %1151 = vmatprep.subr.bf16.mxu0 0
        %1152 = vmatpush1.bf16.msra.mxu0 %v1132
        %1153 = vmatprep.subr.bf16.mxu0 0
        %1154 = vmatpush1.bf16.msra.mxu0 %v1131
        %1155 = vmatprep.subr.bf16.mxu0 0
        %1156 = vmatpush1.bf16.msra.mxu0 %v1130
        %1157 = vmatprep.subr.bf16.mxu0 0
        %1158 = vmatpush2.bf16.msra.mxu0 0
        %1159 = vmatprep.subr.bf16.mxu0 0
        %1160 = vmatpush2.bf16.msra.mxu0 0
        %1161 = vmatprep.subr.bf16.mxu0 0
        %1162 = vmatpush2.bf16.msra.mxu0 0
        %1163 = vmatprep.subr.bf16.mxu0 0
        %1164 = vmatpush2.bf16.msra.mxu0 0
        %1165 = vmatprep.subr.bf16.mxu0 0
        %1166 = vmatpush2.bf16.msra.mxu0 0
        %1167 = vmatprep.subr.bf16.mxu0 0
        %1168 = vmatpush2.bf16.msra.mxu0 0
        %1169 = vmatprep.subr.bf16.mxu0 0
        %1170 = vmatpush2.bf16.msra.mxu0 0
        %1171 = vmatprep.subr.bf16.mxu0 0
        %1172 = vmatpush2.bf16.msra.mxu0 0
        %1173 = vmatprep.mubr.bf16.mxu0 0
        %1174 = vmatmul.mubr.bf16.gmra.mxu0 %v1139
        %v1175 = vpop.f32.mrf.mxu0
        %v1176 = vadd.f32 0.0, %v1175
        %v1177 = vpop.f32.mrf.mxu0
        %v1178 = vpop.f32.mrf.mxu0
        %v1179 = vpop.f32.mrf.mxu0
        %1180 = vdwg.mxu0
        %v1181 = vadd.f32 %v907, %v1176
        %v1182 = vtanh.pop %v1181
        %v1183 = vmul.f32 %v1043, %v899
        %v1184 = vsub.f32 1.0, %v1043
        %v1185 = vmul.f32 %v1184, %v1182
        %v1186 = vadd.f32 %v1183, %v1185
        %s1187 = scalar_lea.vmem [#allocation5], %s901
        %1188 = vst.msk [vmem:[%s1187] sm:$0xff] %vm825, %v1186
      $region77: #{tpu_custom_call.1} parent=71 // loop_footer
        %s898 = sadd.s32 1, %s894
      $region78: #{tpu_custom_call.1} parent=71 // loop_footer_branch
        %893 = sbr.rel target = $region74
      $region79: #{tpu_custom_call.1} parent=71 // loop_exit
        _
      %v1189 = vld [vmem:[#allocation5] sm:$0xff]
      %v1190 = vld [vmem:[#allocation5 + $0x8] sm:$0xff]
      %v1191 = vld [vmem:[#allocation5 + $0x10] sm:$0xff]
      %v1192 = vld [vmem:[#allocation5 + $0x18] sm:$0xff]
      %v1193 = vld [vmem:[#allocation5 + $0x20] sm:$0xff]
      %v1194 = vld [vmem:[#allocation5 + $0x28] sm:$0xff]
      %v1195 = vld [vmem:[%s1] sm:$0xf]
      %v1196 = vpack.c.bf16 %v1189, %v1189
      %v1197 = vpack.c.bf16 %v1190, %v1190
      %v1198 = vpack.c.bf16 %v1191, %v1191
      %v1199 = vpack.c.bf16 %v1192, %v1192
      %v1200 = vpack.c.bf16 %v1193, %v1193
      %v1201 = vpack.c.bf16 %v1194, %v1194
      %v1203 = vsel %vm451, %v1195, 0
      %v1206 = vsel %vm455, %v1196, 0
      %1208 = vmatprep.subr.bf16.mxu0 0
      %1209 = vmatpush1.bf16.msra.mxu0 0
      %1210 = vmatprep.subr.bf16.mxu0 0
      %1211 = vmatpush1.bf16.msra.mxu0 0
      %1212 = vmatprep.subr.bf16.mxu0 0
      %1213 = vmatpush1.bf16.msra.mxu0 0
      %1214 = vmatprep.subr.bf16.mxu0 0
      %1215 = vmatpush1.bf16.msra.mxu0 0
      %1216 = vmatprep.subr.bf16.mxu0 0
      %1217 = vmatpush1.bf16.msra.mxu0 0
      %1218 = vmatprep.subr.bf16.mxu0 0
      %1219 = vmatpush1.bf16.msra.mxu0 0
      %1220 = vmatprep.subr.bf16.mxu0 0
      %1221 = vmatpush1.bf16.msra.mxu0 0
      %1222 = vmatprep.subr.bf16.mxu0 0
      %1223 = vmatpush1.bf16.msra.mxu0 %v1206
      %1224 = vmatprep.subr.bf16.mxu0 0
      %1225 = vmatpush2.bf16.msra.mxu0 0
      %1226 = vmatprep.subr.bf16.mxu0 0
      %1227 = vmatpush2.bf16.msra.mxu0 0
      %1228 = vmatprep.subr.bf16.mxu0 0
      %1229 = vmatpush2.bf16.msra.mxu0 0
      %1230 = vmatprep.subr.bf16.mxu0 0
      %1231 = vmatpush2.bf16.msra.mxu0 0
      %1232 = vmatprep.subr.bf16.mxu0 0
      %1233 = vmatpush2.bf16.msra.mxu0 0
      %1234 = vmatprep.subr.bf16.mxu0 0
      %1235 = vmatpush2.bf16.msra.mxu0 0
      %1236 = vmatprep.subr.bf16.mxu0 0
      %1237 = vmatpush2.bf16.msra.mxu0 0
      %1238 = vmatprep.subr.bf16.mxu0 0
      %1239 = vmatpush2.bf16.msra.mxu0 0
      %1240 = vmatprep.mubr.bf16.mxu0 0
      %1241 = vmatmul.mubr.bf16.gmra.mxu0 %v1203
      %v1242 = vpop.f32.mrf.mxu0
      %v1243 = vadd.f32 0.0, %v1242
      %v1244 = vpop.f32.mrf.mxu0
      %v1245 = vpop.f32.mrf.mxu0
      %v1246 = vpop.f32.mrf.mxu0
      %1247 = vdwg.mxu0
      %v1249 = vsel %vm455, %v1197, 0
      %1251 = vmatprep.subr.bf16.mxu0 0
      %1252 = vmatpush1.bf16.msra.mxu0 0
      %1253 = vmatprep.subr.bf16.mxu0 0
      %1254 = vmatpush1.bf16.msra.mxu0 0
      %1255 = vmatprep.subr.bf16.mxu0 0
      %1256 = vmatpush1.bf16.msra.mxu0 0
      %1257 = vmatprep.subr.bf16.mxu0 0
      %1258 = vmatpush1.bf16.msra.mxu0 0
      %1259 = vmatprep.subr.bf16.mxu0 0
      %1260 = vmatpush1.bf16.msra.mxu0 0
      %1261 = vmatprep.subr.bf16.mxu0 0
      %1262 = vmatpush1.bf16.msra.mxu0 0
      %1263 = vmatprep.subr.bf16.mxu0 0
      %1264 = vmatpush1.bf16.msra.mxu0 0
      %1265 = vmatprep.subr.bf16.mxu0 0
      %1266 = vmatpush1.bf16.msra.mxu0 %v1249
      %1267 = vmatprep.subr.bf16.mxu0 0
      %1268 = vmatpush2.bf16.msra.mxu0 0
      %1269 = vmatprep.subr.bf16.mxu0 0
      %1270 = vmatpush2.bf16.msra.mxu0 0
      %1271 = vmatprep.subr.bf16.mxu0 0
      %1272 = vmatpush2.bf16.msra.mxu0 0
      %1273 = vmatprep.subr.bf16.mxu0 0
      %1274 = vmatpush2.bf16.msra.mxu0 0
      %1275 = vmatprep.subr.bf16.mxu0 0
      %1276 = vmatpush2.bf16.msra.mxu0 0
      %1277 = vmatprep.subr.bf16.mxu0 0
      %1278 = vmatpush2.bf16.msra.mxu0 0
      %1279 = vmatprep.subr.bf16.mxu0 0
      %1280 = vmatpush2.bf16.msra.mxu0 0
      %1281 = vmatprep.subr.bf16.mxu0 0
      %1282 = vmatpush2.bf16.msra.mxu0 0
      %1283 = vmatprep.mubr.bf16.mxu0 0
      %1284 = vmatmul.mubr.bf16.gmra.mxu0 %v1203
      %v1285 = vpop.f32.mrf.mxu0
      %v1286 = vadd.f32 0.0, %v1285
      %v1287 = vpop.f32.mrf.mxu0
      %v1288 = vpop.f32.mrf.mxu0
      %v1289 = vpop.f32.mrf.mxu0
      %1290 = vdwg.mxu0
      %v1292 = vsel %vm455, %v1198, 0
      %1294 = vmatprep.subr.bf16.mxu0 0
      %1295 = vmatpush1.bf16.msra.mxu0 0
      %1296 = vmatprep.subr.bf16.mxu0 0
      %1297 = vmatpush1.bf16.msra.mxu0 0
      %1298 = vmatprep.subr.bf16.mxu0 0
      %1299 = vmatpush1.bf16.msra.mxu0 0
      %1300 = vmatprep.subr.bf16.mxu0 0
      %1301 = vmatpush1.bf16.msra.mxu0 0
      %1302 = vmatprep.subr.bf16.mxu0 0
      %1303 = vmatpush1.bf16.msra.mxu0 0
      %1304 = vmatprep.subr.bf16.mxu0 0
      %1305 = vmatpush1.bf16.msra.mxu0 0
      %1306 = vmatprep.subr.bf16.mxu0 0
      %1307 = vmatpush1.bf16.msra.mxu0 0
      %1308 = vmatprep.subr.bf16.mxu0 0
      %1309 = vmatpush1.bf16.msra.mxu0 %v1292
      %1310 = vmatprep.subr.bf16.mxu0 0
      %1311 = vmatpush2.bf16.msra.mxu0 0
      %1312 = vmatprep.subr.bf16.mxu0 0
      %1313 = vmatpush2.bf16.msra.mxu0 0
      %1314 = vmatprep.subr.bf16.mxu0 0
      %1315 = vmatpush2.bf16.msra.mxu0 0
      %1316 = vmatprep.subr.bf16.mxu0 0
      %1317 = vmatpush2.bf16.msra.mxu0 0
      %1318 = vmatprep.subr.bf16.mxu0 0
      %1319 = vmatpush2.bf16.msra.mxu0 0
      %1320 = vmatprep.subr.bf16.mxu0 0
      %1321 = vmatpush2.bf16.msra.mxu0 0
      %1322 = vmatprep.subr.bf16.mxu0 0
      %1323 = vmatpush2.bf16.msra.mxu0 0
      %1324 = vmatprep.subr.bf16.mxu0 0
      %1325 = vmatpush2.bf16.msra.mxu0 0
      %1326 = vmatprep.mubr.bf16.mxu0 0
      %1327 = vmatmul.mubr.bf16.gmra.mxu0 %v1203
      %v1328 = vpop.f32.mrf.mxu0
      %v1329 = vadd.f32 0.0, %v1328
      %v1330 = vpop.f32.mrf.mxu0
      %v1331 = vpop.f32.mrf.mxu0
      %v1332 = vpop.f32.mrf.mxu0
      %1333 = vdwg.mxu0
      %v1335 = vsel %vm455, %v1199, 0
      %1337 = vmatprep.subr.bf16.mxu0 0
      %1338 = vmatpush1.bf16.msra.mxu0 0
      %1339 = vmatprep.subr.bf16.mxu0 0
      %1340 = vmatpush1.bf16.msra.mxu0 0
      %1341 = vmatprep.subr.bf16.mxu0 0
      %1342 = vmatpush1.bf16.msra.mxu0 0
      %1343 = vmatprep.subr.bf16.mxu0 0
      %1344 = vmatpush1.bf16.msra.mxu0 0
      %1345 = vmatprep.subr.bf16.mxu0 0
      %1346 = vmatpush1.bf16.msra.mxu0 0
      %1347 = vmatprep.subr.bf16.mxu0 0
      %1348 = vmatpush1.bf16.msra.mxu0 0
      %1349 = vmatprep.subr.bf16.mxu0 0
      %1350 = vmatpush1.bf16.msra.mxu0 0
      %1351 = vmatprep.subr.bf16.mxu0 0
      %1352 = vmatpush1.bf16.msra.mxu0 %v1335
      %1353 = vmatprep.subr.bf16.mxu0 0
      %1354 = vmatpush2.bf16.msra.mxu0 0
      %1355 = vmatprep.subr.bf16.mxu0 0
      %1356 = vmatpush2.bf16.msra.mxu0 0
      %1357 = vmatprep.subr.bf16.mxu0 0
      %1358 = vmatpush2.bf16.msra.mxu0 0
      %1359 = vmatprep.subr.bf16.mxu0 0
      %1360 = vmatpush2.bf16.msra.mxu0 0
      %1361 = vmatprep.subr.bf16.mxu0 0
      %1362 = vmatpush2.bf16.msra.mxu0 0
      %1363 = vmatprep.subr.bf16.mxu0 0
      %1364 = vmatpush2.bf16.msra.mxu0 0
      %1365 = vmatprep.subr.bf16.mxu0 0
      %1366 = vmatpush2.bf16.msra.mxu0 0
      %1367 = vmatprep.subr.bf16.mxu0 0
      %1368 = vmatpush2.bf16.msra.mxu0 0
      %1369 = vmatprep.mubr.bf16.mxu0 0
      %1370 = vmatmul.mubr.bf16.gmra.mxu0 %v1203
      %v1371 = vpop.f32.mrf.mxu0
      %v1372 = vadd.f32 0.0, %v1371
      %v1373 = vpop.f32.mrf.mxu0
      %v1374 = vpop.f32.mrf.mxu0
      %v1375 = vpop.f32.mrf.mxu0
      %1376 = vdwg.mxu0
      %v1378 = vsel %vm455, %v1200, 0
      %1380 = vmatprep.subr.bf16.mxu0 0
      %1381 = vmatpush1.bf16.msra.mxu0 0
      %1382 = vmatprep.subr.bf16.mxu0 0
      %1383 = vmatpush1.bf16.msra.mxu0 0
      %1384 = vmatprep.subr.bf16.mxu0 0
      %1385 = vmatpush1.bf16.msra.mxu0 0
      %1386 = vmatprep.subr.bf16.mxu0 0
      %1387 = vmatpush1.bf16.msra.mxu0 0
      %1388 = vmatprep.subr.bf16.mxu0 0
      %1389 = vmatpush1.bf16.msra.mxu0 0
      %1390 = vmatprep.subr.bf16.mxu0 0
      %1391 = vmatpush1.bf16.msra.mxu0 0
      %1392 = vmatprep.subr.bf16.mxu0 0
      %1393 = vmatpush1.bf16.msra.mxu0 0
      %1394 = vmatprep.subr.bf16.mxu0 0
      %1395 = vmatpush1.bf16.msra.mxu0 %v1378
      %1396 = vmatprep.subr.bf16.mxu0 0
      %1397 = vmatpush2.bf16.msra.mxu0 0
      %1398 = vmatprep.subr.bf16.mxu0 0
      %1399 = vmatpush2.bf16.msra.mxu0 0
      %1400 = vmatprep.subr.bf16.mxu0 0
      %1401 = vmatpush2.bf16.msra.mxu0 0
      %1402 = vmatprep.subr.bf16.mxu0 0
      %1403 = vmatpush2.bf16.msra.mxu0 0
      %1404 = vmatprep.subr.bf16.mxu0 0
      %1405 = vmatpush2.bf16.msra.mxu0 0
      %1406 = vmatprep.subr.bf16.mxu0 0
      %1407 = vmatpush2.bf16.msra.mxu0 0
      %1408 = vmatprep.subr.bf16.mxu0 0
      %1409 = vmatpush2.bf16.msra.mxu0 0
      %1410 = vmatprep.subr.bf16.mxu0 0
      %1411 = vmatpush2.bf16.msra.mxu0 0
      %1412 = vmatprep.mubr.bf16.mxu0 0
      %1413 = vmatmul.mubr.bf16.gmra.mxu0 %v1203
      %v1414 = vpop.f32.mrf.mxu0
      %v1415 = vadd.f32 0.0, %v1414
      %v1416 = vpop.f32.mrf.mxu0
      %v1417 = vpop.f32.mrf.mxu0
      %v1418 = vpop.f32.mrf.mxu0
      %1419 = vdwg.mxu0
      %v1421 = vsel %vm455, %v1201, 0
      %1423 = vmatprep.subr.bf16.mxu0 0
      %1424 = vmatpush1.bf16.msra.mxu0 0
      %1425 = vmatprep.subr.bf16.mxu0 0
      %1426 = vmatpush1.bf16.msra.mxu0 0
      %1427 = vmatprep.subr.bf16.mxu0 0
      %1428 = vmatpush1.bf16.msra.mxu0 0
      %1429 = vmatprep.subr.bf16.mxu0 0
      %1430 = vmatpush1.bf16.msra.mxu0 0
      %1431 = vmatprep.subr.bf16.mxu0 0
      %1432 = vmatpush1.bf16.msra.mxu0 0
      %1433 = vmatprep.subr.bf16.mxu0 0
      %1434 = vmatpush1.bf16.msra.mxu0 0
      %1435 = vmatprep.subr.bf16.mxu0 0
      %1436 = vmatpush1.bf16.msra.mxu0 0
      %1437 = vmatprep.subr.bf16.mxu0 0
      %1438 = vmatpush1.bf16.msra.mxu0 %v1421
      %1439 = vmatprep.subr.bf16.mxu0 0
      %1440 = vmatpush2.bf16.msra.mxu0 0
      %1441 = vmatprep.subr.bf16.mxu0 0
      %1442 = vmatpush2.bf16.msra.mxu0 0
      %1443 = vmatprep.subr.bf16.mxu0 0
      %1444 = vmatpush2.bf16.msra.mxu0 0
      %1445 = vmatprep.subr.bf16.mxu0 0
      %1446 = vmatpush2.bf16.msra.mxu0 0
      %1447 = vmatprep.subr.bf16.mxu0 0
      %1448 = vmatpush2.bf16.msra.mxu0 0
      %1449 = vmatprep.subr.bf16.mxu0 0
      %1450 = vmatpush2.bf16.msra.mxu0 0
      %1451 = vmatprep.subr.bf16.mxu0 0
      %1452 = vmatpush2.bf16.msra.mxu0 0
      %1453 = vmatprep.subr.bf16.mxu0 0
      %1454 = vmatpush2.bf16.msra.mxu0 0
      %1455 = vmatprep.mubr.bf16.mxu0 0
      %1456 = vmatmul.mubr.bf16.gmra.mxu0 %v1203
      %v1457 = vpop.f32.mrf.mxu0
      %v1458 = vadd.f32 0.0, %v1457
      %v1459 = vpop.f32.mrf.mxu0
      %v1460 = vpop.f32.mrf.mxu0
      %v1461 = vpop.f32.mrf.mxu0
      %1462 = vdwg.mxu0
      %1469 = vrot.lane.b32.xlu0 %v1243, 32
      %v1470 = vpop.permute.xlu0 %1469
      %1471 = vrot.lane.b32.xlu0 %v1286, 32
      %v1472 = vpop.permute.xlu0 %1471
      %1473 = vrot.lane.b32.xlu0 %v1329, 32
      %v1474 = vpop.permute.xlu0 %1473
      %1475 = vrot.lane.b32.xlu0 %v1372, 32
      %v1476 = vpop.permute.xlu0 %1475
      %1477 = vrot.lane.b32.xlu0 %v1415, 32
      %v1478 = vpop.permute.xlu0 %1477
      %1479 = vrot.lane.b32.xlu0 %v1458, 32
      %v1480 = vpop.permute.xlu0 %1479
      %v1487 = vsel %vm825, %v1189, %v1470
      %v1488 = vsel %vm825, %v1190, %v1472
      %v1489 = vsel %vm825, %v1191, %v1474
      %v1490 = vsel %vm825, %v1192, %v1476
      %v1491 = vsel %vm825, %v1193, %v1478
      %v1492 = vsel %vm825, %v1194, %v1480
      %v1493 = vpack.c.bf16 %v1488, %v1487
      %v1494 = vpack.c.bf16 %v1490, %v1489
      %v1495 = vpack.c.bf16 %v1492, %v1491
      %v1496 = vld [vmem:[%s8] sm:$0xf]
      %v1497 = vld [vmem:[%s8 + $0x4] sm:$0xf]
      %v1498 = vld [vmem:[%s8 + $0x8] sm:$0xf]
      %v1499 = vld [vmem:[%s8 + $0xc] sm:$0xf]
      %v1500 = vld [vmem:[%s8 + $0x10] sm:$0xf]
      %v1501 = vld [vmem:[%s8 + $0x14] sm:$0xf]
      %v1502 = vld [vmem:[%s8 + $0x18] sm:$0xf]
      %v1503 = vld [vmem:[%s8 + $0x1c] sm:$0xf]
      %v1504 = vld [vmem:[%s11] sm:$0x1]
      %v1506 = vlaneseq
      %v1507 = vshrl.u32 %v1506, 7
      %v1508 = vsub.s32 0, %v1507
      %v1509 = vrot.slane %v1504, %v1508
      %v1519 = vunpack.c.l.b16 %v1496
      %v1520 = vunpack.c.l.b16 %v1497
      %v1521 = vunpack.c.l.b16 %v1498
      %v1522 = vunpack.c.l.b16 %v1499
      %v1523 = vunpack.c.l.b16 %v1500
      %v1524 = vunpack.c.l.b16 %v1501
      %v1525 = vunpack.c.l.b16 %v1502
      %v1526 = vunpack.c.l.b16 %v1503
      %v1527 = vpack.c.b16 %v1520, %v1519
      %v1528 = vpack.c.b16 %v1522, %v1521
      %v1529 = vpack.c.b16 %v1524, %v1523
      %v1530 = vpack.c.b16 %v1526, %v1525
      %vm1535 = vcmask 523264
      %v1537 = vsel %vm1535, %v1493, 0
      %v1540 = vsel %vm1535, %v1494, 0
      %v1543 = vsel %vm1535, %v1495, 0
      %1545 = vmatprep.subr.bf16.mxu0 0
      %1546 = vmatpush1.bf16.msra.mxu0 0
      %1547 = vmatprep.subr.bf16.mxu0 0
      %1548 = vmatpush1.bf16.msra.mxu0 0
      %1549 = vmatprep.subr.bf16.mxu0 0
      %1550 = vmatpush1.bf16.msra.mxu0 0
      %1551 = vmatprep.subr.bf16.mxu0 0
      %1552 = vmatpush1.bf16.msra.mxu0 0
      %1553 = vmatprep.subr.bf16.mxu0 0
      %1554 = vmatpush1.bf16.msra.mxu0 %v1530
      %1555 = vmatprep.subr.bf16.mxu0 0
      %1556 = vmatpush1.bf16.msra.mxu0 %v1529
      %1557 = vmatprep.subr.bf16.mxu0 0
      %1558 = vmatpush1.bf16.msra.mxu0 %v1528
      %1559 = vmatprep.subr.bf16.mxu0 0
      %1560 = vmatpush1.bf16.msra.mxu0 %v1527
      %1561 = vmatprep.subr.bf16.mxu0 0
      %1562 = vmatpush2.bf16.msra.mxu0 0
      %1563 = vmatprep.subr.bf16.mxu0 0
      %1564 = vmatpush2.bf16.msra.mxu0 0
      %1565 = vmatprep.subr.bf16.mxu0 0
      %1566 = vmatpush2.bf16.msra.mxu0 0
      %1567 = vmatprep.subr.bf16.mxu0 0
      %1568 = vmatpush2.bf16.msra.mxu0 0
      %1569 = vmatprep.subr.bf16.mxu0 0
      %1570 = vmatpush2.bf16.msra.mxu0 0
      %1571 = vmatprep.subr.bf16.mxu0 0
      %1572 = vmatpush2.bf16.msra.mxu0 0
      %1573 = vmatprep.subr.bf16.mxu0 0
      %1574 = vmatpush2.bf16.msra.mxu0 0
      %1575 = vmatprep.subr.bf16.mxu0 0
      %1576 = vmatpush2.bf16.msra.mxu0 0
      %1577 = vmatprep.mubr.bf16.mxu0 0
      %1578 = vmatmul.mubr.bf16.gmra.mxu0 %v1537
      %v1579 = vpop.f32.mrf.mxu0
      %v1580 = vadd.f32 %v1509, %v1579
      %v1581 = vpop.f32.mrf.mxu0
      %v1582 = vpop.f32.mrf.mxu0
      %v1583 = vadd.f32 %v1509, %v1582
      %v1584 = vpop.f32.mrf.mxu0
      %1585 = vmatprep.mubr.bf16.mxu0 0
      %1586 = vmatmul.mubr.bf16.gmra.mxu0 %v1540
      %v1587 = vpop.f32.mrf.mxu0
      %v1588 = vadd.f32 %v1509, %v1587
      %v1589 = vpop.f32.mrf.mxu0
      %v1590 = vpop.f32.mrf.mxu0
      %v1591 = vadd.f32 %v1509, %v1590
      %v1592 = vpop.f32.mrf.mxu0
      %1593 = vmatprep.mubr.bf16.mxu0 0
      %1594 = vmatmul.mubr.bf16.gmra.mxu0 %v1543
      %v1595 = vpop.f32.mrf.mxu0
      %v1596 = vadd.f32 %v1509, %v1595
      %v1597 = vpop.f32.mrf.mxu0
      %v1598 = vpop.f32.mrf.mxu0
      %v1599 = vadd.f32 %v1509, %v1598
      %v1600 = vpop.f32.mrf.mxu0
      %1601 = vdwg.mxu0
      %1602 = vst.msk [vmem:[#allocation2] sm:$0xff] %vm825, %v1580
      %1603 = vst.msk [vmem:[#allocation2 + $0x8] sm:$0xff] %vm825, %v1583
      %1604 = vst.msk [vmem:[#allocation2 + $0x10] sm:$0xff] %vm825, %v1588
      %1605 = vst.msk [vmem:[#allocation2 + $0x18] sm:$0xff] %vm825, %v1591
      %1606 = vst.msk [vmem:[#allocation2 + $0x20] sm:$0xff] %vm825, %v1596
      %1607 = vst.msk [vmem:[#allocation2 + $0x28] sm:$0xff] %vm825, %v1599
      %1614 = vrot.lane.b32.xlu0 %v1580, 96
      %v1615 = vpop.permute.xlu0 %1614
      %1616 = vrot.lane.b32.xlu0 %v1583, 96
      %v1617 = vpop.permute.xlu0 %1616
      %1618 = vrot.lane.b32.xlu0 %v1588, 96
      %v1619 = vpop.permute.xlu0 %1618
      %1620 = vrot.lane.b32.xlu0 %v1591, 96
      %v1621 = vpop.permute.xlu0 %1620
      %1622 = vrot.lane.b32.xlu0 %v1596, 96
      %v1623 = vpop.permute.xlu0 %1622
      %1624 = vrot.lane.b32.xlu0 %v1599, 96
      %v1625 = vpop.permute.xlu0 %1624
      %1632 = vst.msk [vmem:[#allocation3] sm:$0xff] %vm825, %v1615
      %1633 = vst.msk [vmem:[#allocation3 + $0x8] sm:$0xff] %vm825, %v1617
      %1634 = vst.msk [vmem:[#allocation3 + $0x10] sm:$0xff] %vm825, %v1619
      %1635 = vst.msk [vmem:[#allocation3 + $0x18] sm:$0xff] %vm825, %v1621
      %1636 = vst.msk [vmem:[#allocation3 + $0x20] sm:$0xff] %vm825, %v1623
      %1637 = vst.msk [vmem:[#allocation3 + $0x28] sm:$0xff] %vm825, %v1625
      %1638 = vrot.lane.b32.xlu0 %v1580, 64
      %v1639 = vpop.permute.xlu0 %1638
      %1640 = vrot.lane.b32.xlu0 %v1583, 64
      %v1641 = vpop.permute.xlu0 %1640
      %1642 = vrot.lane.b32.xlu0 %v1588, 64
      %v1643 = vpop.permute.xlu0 %1642
      %1644 = vrot.lane.b32.xlu0 %v1591, 64
      %v1645 = vpop.permute.xlu0 %1644
      %1646 = vrot.lane.b32.xlu0 %v1596, 64
      %v1647 = vpop.permute.xlu0 %1646
      %1648 = vrot.lane.b32.xlu0 %v1599, 64
      %v1649 = vpop.permute.xlu0 %1648
      %1656 = vst.msk [vmem:[#allocation4] sm:$0xff] %vm825, %v1639
      %1657 = vst.msk [vmem:[#allocation4 + $0x8] sm:$0xff] %vm825, %v1641
      %1658 = vst.msk [vmem:[#allocation4 + $0x10] sm:$0xff] %vm825, %v1643
      %1659 = vst.msk [vmem:[#allocation4 + $0x18] sm:$0xff] %vm825, %v1645
      %1660 = vst.msk [vmem:[#allocation4 + $0x20] sm:$0xff] %vm825, %v1647
      %1661 = vst.msk [vmem:[#allocation4 + $0x28] sm:$0xff] %vm825, %v1649
      %v1662 = vld [vmem:[%s7] sm:$0x1]
      %v1664 = vlaneseq
      %v1665 = vshrl.u32 %v1664, 7
      %v1666 = vsub.s32 0, %v1665
      %v1667 = vrot.slane %v1662, %v1666
      loop: start=0, step=1, limit=6
      $region80: #{tpu_custom_call.1} parent=71 // loop_pre_header
        _
      $region81: #{tpu_custom_call.1} parent=71 // loop_header
        %s1670 = sphi 0, %s1674
        %p1671 = scmp.ge.s32.totalorder %s1670, 6
        %v1675 = vphi %v1667, %v1961
      $region82: #{tpu_custom_call.1} parent=71 // loop_header_branch
        %1673 = sbr.rel (%p1671) target = $region86
      $region83: #{tpu_custom_call.1} parent=71 // loop_body
        %v1676 = vld [vmem:[%s1] sm:$0xf]
        %s1677 = smul.u32 %s1670, 8
        %s1678 = scalar_lea.vmem [#allocation2], %s1677
        %v1679 = vld [vmem:[%s1678] sm:$0xff]
        %s1680 = scalar_lea.vmem [#allocation3], %s1677
        %v1681 = vld [vmem:[%s1680] sm:$0xff]
        %s1682 = scalar_lea.vmem [#allocation4], %s1677
        %v1683 = vld [vmem:[%s1682] sm:$0xff]
        %v1684 = vpack.c.bf16 %v1675, %v1675
        %v1686 = vsel %vm451, %v1676, 0
        %v1689 = vsel %vm455, %v1684, 0
        %1691 = vmatprep.subr.bf16.mxu0 0
        %1692 = vmatpush1.bf16.msra.mxu0 0
        %1693 = vmatprep.subr.bf16.mxu0 0
        %1694 = vmatpush1.bf16.msra.mxu0 0
        %1695 = vmatprep.subr.bf16.mxu0 0
        %1696 = vmatpush1.bf16.msra.mxu0 0
        %1697 = vmatprep.subr.bf16.mxu0 0
        %1698 = vmatpush1.bf16.msra.mxu0 0
        %1699 = vmatprep.subr.bf16.mxu0 0
        %1700 = vmatpush1.bf16.msra.mxu0 0
        %1701 = vmatprep.subr.bf16.mxu0 0
        %1702 = vmatpush1.bf16.msra.mxu0 0
        %1703 = vmatprep.subr.bf16.mxu0 0
        %1704 = vmatpush1.bf16.msra.mxu0 0
        %1705 = vmatprep.subr.bf16.mxu0 0
        %1706 = vmatpush1.bf16.msra.mxu0 %v1689
        %1707 = vmatprep.subr.bf16.mxu0 0
        %1708 = vmatpush2.bf16.msra.mxu0 0
        %1709 = vmatprep.subr.bf16.mxu0 0
        %1710 = vmatpush2.bf16.msra.mxu0 0
        %1711 = vmatprep.subr.bf16.mxu0 0
        %1712 = vmatpush2.bf16.msra.mxu0 0
        %1713 = vmatprep.subr.bf16.mxu0 0
        %1714 = vmatpush2.bf16.msra.mxu0 0
        %1715 = vmatprep.subr.bf16.mxu0 0
        %1716 = vmatpush2.bf16.msra.mxu0 0
        %1717 = vmatprep.subr.bf16.mxu0 0
        %1718 = vmatpush2.bf16.msra.mxu0 0
        %1719 = vmatprep.subr.bf16.mxu0 0
        %1720 = vmatpush2.bf16.msra.mxu0 0
        %1721 = vmatprep.subr.bf16.mxu0 0
        %1722 = vmatpush2.bf16.msra.mxu0 0
        %1723 = vmatprep.mubr.bf16.mxu0 0
        %1724 = vmatmul.mubr.bf16.gmra.mxu0 %v1686
        %v1725 = vpop.f32.mrf.mxu0
        %v1726 = vadd.f32 0.0, %v1725
        %v1727 = vpop.f32.mrf.mxu0
        %v1728 = vpop.f32.mrf.mxu0
        %v1729 = vpop.f32.mrf.mxu0
        %1730 = vdwg.mxu0
        %1732 = vrot.lane.b32.xlu0 %v1726, 32
        %v1733 = vpop.permute.xlu0 %1732
        %v1735 = vsel %vm825, %v1675, %v1733
        %v1736 = vpack.c.bf16 %v1735, %v1735
        %v1737 = vld [vmem:[%s9] sm:$0xf]
        %v1738 = vld [vmem:[%s9 + $0x4] sm:$0xf]
        %v1739 = vld [vmem:[%s9 + $0x8] sm:$0xf]
        %v1740 = vld [vmem:[%s9 + $0xc] sm:$0xf]
        %v1741 = vld [vmem:[%s9 + $0x10] sm:$0xf]
        %v1742 = vld [vmem:[%s9 + $0x14] sm:$0xf]
        %v1743 = vld [vmem:[%s9 + $0x18] sm:$0xf]
        %v1744 = vld [vmem:[%s9 + $0x1c] sm:$0xf]
        %v1753 = vunpack.c.l.b16 %v1737
        %v1754 = vunpack.c.l.b16 %v1738
        %v1755 = vunpack.c.l.b16 %v1739
        %v1756 = vunpack.c.l.b16 %v1740
        %v1757 = vunpack.c.l.b16 %v1741
        %v1758 = vunpack.c.l.b16 %v1742
        %v1759 = vunpack.c.l.b16 %v1743
        %v1760 = vunpack.c.l.b16 %v1744
        %v1761 = vpack.c.b16 %v1754, %v1753
        %v1762 = vpack.c.b16 %v1756, %v1755
        %v1763 = vpack.c.b16 %v1758, %v1757
        %v1764 = vpack.c.b16 %v1760, %v1759
        %v1770 = vsel %vm1535, %v1736, 0
        %1772 = vmatprep.subr.bf16.mxu0 0
        %1773 = vmatpush1.bf16.msra.mxu0 0
        %1774 = vmatprep.subr.bf16.mxu0 0
        %1775 = vmatpush1.bf16.msra.mxu0 0
        %1776 = vmatprep.subr.bf16.mxu0 0
        %1777 = vmatpush1.bf16.msra.mxu0 0
        %1778 = vmatprep.subr.bf16.mxu0 0
        %1779 = vmatpush1.bf16.msra.mxu0 0
        %1780 = vmatprep.subr.bf16.mxu0 0
        %1781 = vmatpush1.bf16.msra.mxu0 %v1764
        %1782 = vmatprep.subr.bf16.mxu0 0
        %1783 = vmatpush1.bf16.msra.mxu0 %v1763
        %1784 = vmatprep.subr.bf16.mxu0 0
        %1785 = vmatpush1.bf16.msra.mxu0 %v1762
        %1786 = vmatprep.subr.bf16.mxu0 0
        %1787 = vmatpush1.bf16.msra.mxu0 %v1761
        %1788 = vmatprep.subr.bf16.mxu0 0
        %1789 = vmatpush2.bf16.msra.mxu0 0
        %1790 = vmatprep.subr.bf16.mxu0 0
        %1791 = vmatpush2.bf16.msra.mxu0 0
        %1792 = vmatprep.subr.bf16.mxu0 0
        %1793 = vmatpush2.bf16.msra.mxu0 0
        %1794 = vmatprep.subr.bf16.mxu0 0
        %1795 = vmatpush2.bf16.msra.mxu0 0
        %1796 = vmatprep.subr.bf16.mxu0 0
        %1797 = vmatpush2.bf16.msra.mxu0 0
        %1798 = vmatprep.subr.bf16.mxu0 0
        %1799 = vmatpush2.bf16.msra.mxu0 0
        %1800 = vmatprep.subr.bf16.mxu0 0
        %1801 = vmatpush2.bf16.msra.mxu0 0
        %1802 = vmatprep.subr.bf16.mxu0 0
        %1803 = vmatpush2.bf16.msra.mxu0 0
        %1804 = vmatprep.mubr.bf16.mxu0 0
        %1805 = vmatmul.mubr.bf16.gmra.mxu0 %v1770
        %v1806 = vpop.f32.mrf.mxu0
        %v1807 = vadd.f32 0.0, %v1806
        %v1808 = vpop.f32.mrf.mxu0
        %v1809 = vpop.f32.mrf.mxu0
        %v1810 = vpop.f32.mrf.mxu0
        %1811 = vdwg.mxu0
        %v1812 = vadd.f32 %v1679, %v1807
        %v1813 = vxor.u32 %v1812, 2147483648
        %v1814 = vmul.f32 %v1813, 1.442695
        %v1815 = vpow.pop %v1814
        %v1816 = vadd.f32 %v1815, 1.0
        %v1817 = vrcp.pop %v1816
        %v1818 = vmul.f32 1.0, %v1817
        %1820 = vrot.lane.b32.xlu0 %v1807, 96
        %v1821 = vpop.permute.xlu0 %1820
        %v1823 = vadd.f32 %v1681, %v1821
        %v1824 = vxor.u32 %v1823, 2147483648
        %v1825 = vmul.f32 %v1824, 1.442695
        %v1826 = vpow.pop %v1825
        %v1827 = vadd.f32 %v1826, 1.0
        %v1828 = vrcp.pop %v1827
        %v1829 = vmul.f32 1.0, %v1828
        %v1830 = vmul.f32 %v1829, %v1675
        %v1831 = vpack.c.bf16 %v1830, %v1830
        %v1833 = vsel %vm455, %v1831, 0
        %1835 = vmatprep.subr.bf16.mxu0 0
        %1836 = vmatpush1.bf16.msra.mxu0 0
        %1837 = vmatprep.subr.bf16.mxu0 0
        %1838 = vmatpush1.bf16.msra.mxu0 0
        %1839 = vmatprep.subr.bf16.mxu0 0
        %1840 = vmatpush1.bf16.msra.mxu0 0
        %1841 = vmatprep.subr.bf16.mxu0 0
        %1842 = vmatpush1.bf16.msra.mxu0 0
        %1843 = vmatprep.subr.bf16.mxu0 0
        %1844 = vmatpush1.bf16.msra.mxu0 0
        %1845 = vmatprep.subr.bf16.mxu0 0
        %1846 = vmatpush1.bf16.msra.mxu0 0
        %1847 = vmatprep.subr.bf16.mxu0 0
        %1848 = vmatpush1.bf16.msra.mxu0 0
        %1849 = vmatprep.subr.bf16.mxu0 0
        %1850 = vmatpush1.bf16.msra.mxu0 %v1833
        %1851 = vmatprep.subr.bf16.mxu0 0
        %1852 = vmatpush2.bf16.msra.mxu0 0
        %1853 = vmatprep.subr.bf16.mxu0 0
        %1854 = vmatpush2.bf16.msra.mxu0 0
        %1855 = vmatprep.subr.bf16.mxu0 0
        %1856 = vmatpush2.bf16.msra.mxu0 0
        %1857 = vmatprep.subr.bf16.mxu0 0
        %1858 = vmatpush2.bf16.msra.mxu0 0
        %1859 = vmatprep.subr.bf16.mxu0 0
        %1860 = vmatpush2.bf16.msra.mxu0 0
        %1861 = vmatprep.subr.bf16.mxu0 0
        %1862 = vmatpush2.bf16.msra.mxu0 0
        %1863 = vmatprep.subr.bf16.mxu0 0
        %1864 = vmatpush2.bf16.msra.mxu0 0
        %1865 = vmatprep.subr.bf16.mxu0 0
        %1866 = vmatpush2.bf16.msra.mxu0 0
        %1867 = vmatprep.mubr.bf16.mxu0 0
        %1868 = vmatmul.mubr.bf16.gmra.mxu0 %v1686
        %v1869 = vpop.f32.mrf.mxu0
        %v1870 = vadd.f32 0.0, %v1869
        %v1871 = vpop.f32.mrf.mxu0
        %v1872 = vpop.f32.mrf.mxu0
        %v1873 = vpop.f32.mrf.mxu0
        %1874 = vdwg.mxu0
        %1876 = vrot.lane.b32.xlu0 %v1870, 32
        %v1877 = vpop.permute.xlu0 %1876
        %v1879 = vsel %vm825, %v1830, %v1877
        %v1880 = vpack.c.bf16 %v1879, %v1879
        %v1881 = vld [vmem:[%s10] sm:$0xf]
        %v1882 = vld [vmem:[%s10 + $0x4] sm:$0xf]
        %v1883 = vld [vmem:[%s10 + $0x8] sm:$0xf]
        %v1884 = vld [vmem:[%s10 + $0xc] sm:$0xf]
        %v1885 = vld [vmem:[%s10 + $0x10] sm:$0xf]
        %v1886 = vld [vmem:[%s10 + $0x14] sm:$0xf]
        %v1887 = vld [vmem:[%s10 + $0x18] sm:$0xf]
        %v1888 = vld [vmem:[%s10 + $0x1c] sm:$0xf]
        %v1897 = vunpack.c.l.b16 %v1881
        %v1898 = vunpack.c.l.b16 %v1882
        %v1899 = vunpack.c.l.b16 %v1883
        %v1900 = vunpack.c.l.b16 %v1884
        %v1901 = vunpack.c.l.b16 %v1885
        %v1902 = vunpack.c.l.b16 %v1886
        %v1903 = vunpack.c.l.b16 %v1887
        %v1904 = vunpack.c.l.b16 %v1888
        %v1905 = vpack.c.b16 %v1898, %v1897
        %v1906 = vpack.c.b16 %v1900, %v1899
        %v1907 = vpack.c.b16 %v1902, %v1901
        %v1908 = vpack.c.b16 %v1904, %v1903
        %v1914 = vsel %vm1535, %v1880, 0
        %1916 = vmatprep.subr.bf16.mxu0 0
        %1917 = vmatpush1.bf16.msra.mxu0 0
        %1918 = vmatprep.subr.bf16.mxu0 0
        %1919 = vmatpush1.bf16.msra.mxu0 0
        %1920 = vmatprep.subr.bf16.mxu0 0
        %1921 = vmatpush1.bf16.msra.mxu0 0
        %1922 = vmatprep.subr.bf16.mxu0 0
        %1923 = vmatpush1.bf16.msra.mxu0 0
        %1924 = vmatprep.subr.bf16.mxu0 0
        %1925 = vmatpush1.bf16.msra.mxu0 %v1908
        %1926 = vmatprep.subr.bf16.mxu0 0
        %1927 = vmatpush1.bf16.msra.mxu0 %v1907
        %1928 = vmatprep.subr.bf16.mxu0 0
        %1929 = vmatpush1.bf16.msra.mxu0 %v1906
        %1930 = vmatprep.subr.bf16.mxu0 0
        %1931 = vmatpush1.bf16.msra.mxu0 %v1905
        %1932 = vmatprep.subr.bf16.mxu0 0
        %1933 = vmatpush2.bf16.msra.mxu0 0
        %1934 = vmatprep.subr.bf16.mxu0 0
        %1935 = vmatpush2.bf16.msra.mxu0 0
        %1936 = vmatprep.subr.bf16.mxu0 0
        %1937 = vmatpush2.bf16.msra.mxu0 0
        %1938 = vmatprep.subr.bf16.mxu0 0
        %1939 = vmatpush2.bf16.msra.mxu0 0
        %1940 = vmatprep.subr.bf16.mxu0 0
        %1941 = vmatpush2.bf16.msra.mxu0 0
        %1942 = vmatprep.subr.bf16.mxu0 0
        %1943 = vmatpush2.bf16.msra.mxu0 0
        %1944 = vmatprep.subr.bf16.mxu0 0
        %1945 = vmatpush2.bf16.msra.mxu0 0
        %1946 = vmatprep.subr.bf16.mxu0 0
        %1947 = vmatpush2.bf16.msra.mxu0 0
        %1948 = vmatprep.mubr.bf16.mxu0 0
        %1949 = vmatmul.mubr.bf16.gmra.mxu0 %v1914
        %v1950 = vpop.f32.mrf.mxu0
        %v1951 = vadd.f32 0.0, %v1950
        %v1952 = vpop.f32.mrf.mxu0
        %v1953 = vpop.f32.mrf.mxu0
        %v1954 = vpop.f32.mrf.mxu0
        %1955 = vdwg.mxu0
        %v1956 = vadd.f32 %v1683, %v1951
        %v1957 = vtanh.pop %v1956
        %v1958 = vmul.f32 %v1818, %v1675
        %v1959 = vsub.f32 1.0, %v1818
        %v1960 = vmul.f32 %v1959, %v1957
        %v1961 = vadd.f32 %v1958, %v1960
      $region84: #{tpu_custom_call.1} parent=71 // loop_footer
        %s1674 = sadd.s32 1, %s1670
      $region85: #{tpu_custom_call.1} parent=71 // loop_footer_branch
        %1669 = sbr.rel target = $region81
      $region86: #{tpu_custom_call.1} parent=71 // loop_exit
        _
      %v1962 = vld [vmem:[%s12] sm:$0xff]
      %v1963 = vld [vmem:[%s12 + $0x8] sm:$0xff]
      %v1964 = vld [vmem:[%s12 + $0x10] sm:$0xff]
      %v1965 = vld [vmem:[%s12 + $0x18] sm:$0xff]
      %v1967 = vsel %vm825, %v1675, 0
      %1969 = vmatprep.subr.mxu0 0.0
      %1970 = vmatpush1.msra.mxu0 0.0
      %1971 = vmatprep.subr.mxu0 0.0
      %1972 = vmatpush1.msra.mxu0 0.0
      %1973 = vmatprep.subr.mxu0 0.0
      %1974 = vmatpush1.msra.mxu0 0.0
      %1975 = vmatprep.subr.mxu0 0.0
      %1976 = vmatpush1.msra.mxu0 0.0
      %1977 = vmatprep.subr.mxu0 0.0
      %1978 = vmatpush1.msra.mxu0 0.0
      %1979 = vmatprep.subr.mxu0 0.0
      %1980 = vmatpush1.msra.mxu0 0.0
      %1981 = vmatprep.subr.mxu0 0.0
      %1982 = vmatpush1.msra.mxu0 0.0
      %1983 = vmatprep.subr.mxu0 0.0
      %1984 = vmatpush1.msra.mxu0 0.0
      %1985 = vmatprep.subr.mxu0 0.0
      %1986 = vmatpush1.msra.mxu0 0.0
      %1987 = vmatprep.subr.mxu0 0.0
      %1988 = vmatpush1.msra.mxu0 0.0
      %1989 = vmatprep.subr.mxu0 0.0
      %1990 = vmatpush1.msra.mxu0 0.0
      %1991 = vmatprep.subr.mxu0 0.0
      %1992 = vmatpush1.msra.mxu0 0.0
      %1993 = vmatprep.subr.mxu0 0.0
      %1994 = vmatpush1.msra.mxu0 %v1965
      %1995 = vmatprep.subr.mxu0 0.0
      %1996 = vmatpush1.msra.mxu0 %v1964
      %1997 = vmatprep.subr.mxu0 0.0
      %1998 = vmatpush1.msra.mxu0 %v1963
      %1999 = vmatprep.subr.mxu0 0.0
      %2000 = vmatpush1.msra.mxu0 %v1962
      %2001 = vmatprep.subr.mxu0 0.0
      %2002 = vmatpush2.msra.mxu0 0.0
      %2003 = vmatprep.subr.mxu0 0.0
      %2004 = vmatpush2.msra.mxu0 0.0
      %2005 = vmatprep.subr.mxu0 0.0
      %2006 = vmatpush2.msra.mxu0 0.0
      %2007 = vmatprep.subr.mxu0 0.0
      %2008 = vmatpush2.msra.mxu0 0.0
      %2009 = vmatprep.subr.mxu0 0.0
      %2010 = vmatpush2.msra.mxu0 0.0
      %2011 = vmatprep.subr.mxu0 0.0
      %2012 = vmatpush2.msra.mxu0 0.0
      %2013 = vmatprep.subr.mxu0 0.0
      %2014 = vmatpush2.msra.mxu0 0.0
      %2015 = vmatprep.subr.mxu0 0.0
      %2016 = vmatpush2.msra.mxu0 0.0
      %2017 = vmatprep.subr.mxu0 0.0
      %2018 = vmatpush2.msra.mxu0 0.0
      %2019 = vmatprep.subr.mxu0 0.0
      %2020 = vmatpush2.msra.mxu0 0.0
      %2021 = vmatprep.subr.mxu0 0.0
      %2022 = vmatpush2.msra.mxu0 0.0
      %2023 = vmatprep.subr.mxu0 0.0
      %2024 = vmatpush2.msra.mxu0 0.0
      %2025 = vmatprep.subr.mxu0 0.0
      %2026 = vmatpush2.msra.mxu0 0.0
      %2027 = vmatprep.subr.mxu0 0.0
      %2028 = vmatpush2.msra.mxu0 0.0
      %2029 = vmatprep.subr.mxu0 0.0
      %2030 = vmatpush2.msra.mxu0 0.0
      %2031 = vmatprep.subr.mxu0 0.0
      %2032 = vmatpush2.msra.mxu0 0.0
      %2033 = vmatprep.mubr.f32.mxu0 0.0
      %2034 = vmatmul.mubr.f32.gmra.mxu0 %v1967
      %v2035 = vpop.f32.mrf.mxu0
      %v2036 = vadd.f32 0.0, %v2035
      %v2037 = vpop.f32.mrf.mxu0
      %2038 = vdwg.mxu0
      %vm2039 = vcmask 7168
      %v2040 = vsel %vm2039, %v2036, 0.0
      %2041 = vadd.xlane.f32.xlu0 %v2040
      %v2042 = vpop.xlane.xlu0 %2041
      %v2043 = vrot.slane %v2042, 4
      %v2044 = vadd.f32 %v2042, %v2043
      %v2045 = vrot.slane %v2044, 2
      %v2046 = vadd.f32 %v2044, %v2045
      %v2047 = vrot.slane %v2046, 1
      %v2048 = vadd.f32 %v2046, %v2047
      %s2049 = vtos %v2048
      %v2050 = vstv %s2049
      %vm2051 = vcmask 0
      %2052 = vst.msk [vmem:[%s436] sm:$0x1] %vm2051, %v2050
      %p2053 = scmp.lt.s32.totalorder %s24, 1
      %s2054 = scalar_select %p2053, %s24, 1
      %s2055 = scalar_lea.vmem %s13, %s2054
      // Predicated region
      $region87: #{tpu_custom_call.1} parent=71 // pred_check
        %p2056 = pneg %p320
      $region88: #{tpu_custom_call.1} parent=71 // pred_check_branch
        %2058 = sbr.rel (%p2056) target = $region90
      $region89: #{tpu_custom_call.1} parent=71 // pred_region
        _
      $region90: #{tpu_custom_call.1} parent=71 // pred_fallthru
        _
    $region72: #{tpu_custom_call.1} parent=5 // pred_fallthru
      _
    %p2059 = scmp.le.s32.totalorder 2, %s19
    // Predicated region
    $region91: #{tpu_custom_call.1} parent=5 // pred_check
      %p2060 = pneg %p2059
    $region92: #{tpu_custom_call.1} parent=5 // pred_check_branch
      %2062 = sbr.rel (%p2060) target = $region94
    $region93: #{tpu_custom_call.1} parent=5 // pred_region
      %s2063 = ssub.s32 %s19, 2
      // Predicated region
      $region95: #{tpu_custom_call.1} parent=93 // pred_check
        %p2064 = pneg %p326
      $region96: #{tpu_custom_call.1} parent=93 // pred_check_branch
        %2066 = sbr.rel (%p2064) target = $region98
      $region97: #{tpu_custom_call.1} parent=93 // pred_region
        %p2067 = scmp.lt.s32.totalorder %s25, 1
        %s2068 = scalar_select %p2067, %s25, 1
        %s2069 = scalar_lea.vmem %s13, %s2068
      $region98: #{tpu_custom_call.1} parent=93 // pred_fallthru
        _
    $region94: #{tpu_custom_call.1} parent=5 // pred_fallthru
      _
  $region6: #{tpu_custom_call.1} parent=0 // loop_footer
    %s23 = sadd.s32 1, %s19
  $region7: #{tpu_custom_call.1} parent=0 // loop_footer_branch
    %18 = sbr.rel target = $region3
  $region8: #{tpu_custom_call.1} parent=0 // loop_exit
    _

</llo_original>
